<compile_context>
chip_gen: v7x
topology: tpu7x:2x2x1
jax: 0.10.0
libtpu: 0.0.40
codegen_flags: <defaults>
</compile_context>

<pallas_src>
import jax
import jax.numpy as jnp
from jax.experimental import pallas as pl
from jax.experimental.pallas import tpu as pltpu

EPS = 1e-5


def bn_relu_kernel(x_ref, gb_ref, o_ref):
    # x_ref: (Cb, S) block; gb_ref: (Cb, 2) = [gamma | beta]; o_ref: (Cb, S)
    x = x_ref[...].astype(jnp.float32)                       # (Cb, S)
    inv_s = 1.0 / x.shape[-1]                                # static python float

    # One pass over the slab for both moments.
    s1 = jnp.sum(x, axis=-1, keepdims=True)                  # (Cb, 1)
    s2 = jnp.sum(x * x, axis=-1, keepdims=True)              # (Cb, 1)
    mean = s1 * inv_s
    var = s2 * inv_s - mean * mean                           # biased variance

    gb = gb_ref[...].astype(jnp.float32)                     # (Cb, 2)
    gamma = gb[:, 0:1]
    beta = gb[:, 1:2]

    # Fold normalization + affine into per-channel scale/shift (tiny vectors).
    scale = gamma * jax.lax.rsqrt(var + EPS)                 # (Cb, 1)
    shift = beta - mean * scale                              # (Cb, 1)

    # Single cheap pass over the big slab: mul, add, max.
    y = x * scale + shift                                    # lane-broadcast
    o_ref[...] = jnp.maximum(y, 0.0).astype(o_ref.dtype)


def batchnorm_relu(x_nchw, gamma, beta):
    """x_nchw: (N, C, H, W); gamma/beta: (C,). Returns (N, C, H, W)."""
    N, C, H, W = x_nchw.shape
    S = N * H * W

    # NCHW -> (C, S). Free reshape when N == 1 (the module's case).
    if N == 1:
        x2d = x_nchw.reshape(C, S)
    else:
        x2d = jnp.transpose(x_nchw, (1, 0, 2, 3)).reshape(C, S)

    # Pack affine params into one (C, 2) lane-padded array.
    gb = jnp.stack([gamma, beta], axis=-1).astype(jnp.float32)   # (C, 2)

    # Two parallel channel blocks when cleanly divisible (multiple of 8 each),
    # else a single whole-array block.
    if C % 16 == 0:
        c_block = C // 2
        grid = (2,)
    else:
        c_block = C
        grid = (1,)

    out2d = pl.pallas_call(
        bn_relu_kernel,
        out_shape=jax.ShapeDtypeStruct((C, S), x_nchw.dtype),
        grid=grid,
        in_specs=[
            pl.BlockSpec((c_block, S), lambda i: (i, 0)),
            pl.BlockSpec((c_block, 2), lambda i: (i, 0)),
        ],
        out_specs=pl.BlockSpec((c_block, S), lambda i: (i, 0)),
        compiler_params=pltpu.CompilerParams(
            dimension_semantics=("parallel",)),
    )(x2d, gb)

    # (C, S) -> NCHW (free reshape for N == 1).
    if N == 1:
        return out2d.reshape(N, C, H, W)
    return jnp.transpose(out2d.reshape(C, N, H, W), (1, 0, 2, 3))


def reference(x_nchw, gamma, beta):
    mean = jnp.mean(x_nchw, axis=(0, 2, 3), keepdims=True)
    var = jnp.mean((x_nchw - mean) ** 2, axis=(0, 2, 3), keepdims=True)
    y = (x_nchw - mean) * jax.lax.rsqrt(var + EPS)
    y = y * gamma.reshape(1, -1, 1, 1) + beta.reshape(1, -1, 1, 1)
    return jnp.maximum(y, 0.0)


if __name__ == "__main__":
    key = jax.random.PRNGKey(0)
    kx, kg, kb = jax.random.split(key, 3)

    # Shape from the module's forward: x323 = randn([1, 1088, 14, 14])
    N, C, H, W = 1, 1088, 14, 14
    x = jax.random.normal(kx, (N, C, H, W), dtype=jnp.float32)
    # Non-trivial affine params (PyTorch default init is ones/zeros).
    gamma = 1.0 + 0.1 * jax.random.normal(kg, (C,), dtype=jnp.float32)
    beta = 0.1 * jax.random.normal(kb, (C,), dtype=jnp.float32)

    out = batchnorm_relu(x, gamma, beta)
    out = jax.block_until_ready(out)

    ref = reference(x, gamma, beta)
    assert out.shape == (N, C, H, W)
    assert jnp.allclose(out, ref, atol=1e-4, rtol=1e-4), "mismatch vs reference"

    print("KERNEL_OK")
</pallas_src>

<mosaic_0001>
module attributes {stable_mosaic.version = 11 : i64} {
  func.func @bn_relu_kernel(%arg0: i32, %arg1: memref<544x196xf32, #tpu.memory_space<vmem>>, %arg2: memref<544x2xf32, #tpu.memory_space<vmem>>, %arg3: memref<544x196xf32, #tpu.memory_space<vmem>>) attributes {dimension_semantics = [#tpu.dimension_semantics<parallel>], iteration_bounds = array<i64: 2>, scalar_prefetch = 0 : i64, scratch_operands = 0 : i64, tpu.core_type = #tpu.core_type<tc>, window_params = [{transform_indices = @transform_0, window_bounds = array<i64: 544, 196>}, {transform_indices = @transform_1, window_bounds = array<i64: 544, 2>}, {transform_indices = @transform_2, window_bounds = array<i64: 544, 196>}]} {
    %c0 = arith.constant 0 : index
    %c0_0 = arith.constant 0 : index
    %0 = vector.load %arg1[%c0, %c0_0] : memref<544x196xf32, #tpu.memory_space<vmem>>, vector<544x196xf32>
    %cst = arith.constant dense<0.000000e+00> : vector<544xf32>
    %1 = vector.multi_reduction <add>, %0, %cst [1] : vector<544x196xf32> to vector<544xf32>
    %2 = vector.shape_cast %1 : vector<544xf32> to vector<544x1xf32>
    %3 = arith.mulf %0, %0 : vector<544x196xf32>
    %cst_1 = arith.constant dense<0.000000e+00> : vector<544xf32>
    %4 = vector.multi_reduction <add>, %3, %cst_1 [1] : vector<544x196xf32> to vector<544xf32>
    %5 = vector.shape_cast %4 : vector<544xf32> to vector<544x1xf32>
    %cst_2 = arith.constant 0.00510204071 : f32
    %6 = vector.broadcast %cst_2 : f32 to vector<544x1xf32>
    %7 = arith.mulf %2, %6 : vector<544x1xf32>
    %cst_3 = arith.constant 0.00510204071 : f32
    %8 = vector.broadcast %cst_3 : f32 to vector<544x1xf32>
    %9 = arith.mulf %5, %8 : vector<544x1xf32>
    %10 = arith.mulf %7, %7 : vector<544x1xf32>
    %11 = arith.subf %9, %10 : vector<544x1xf32>
    %c0_4 = arith.constant 0 : index
    %c0_5 = arith.constant 0 : index
    %12 = vector.load %arg2[%c0_4, %c0_5] : memref<544x2xf32, #tpu.memory_space<vmem>>, vector<544x2xf32>
    %13 = vector.extract_strided_slice %12 {offsets = [0, 0], sizes = [544, 1], strides = [1, 1]} : vector<544x2xf32> to vector<544x1xf32>
    %14 = vector.extract_strided_slice %12 {offsets = [0, 1], sizes = [544, 1], strides = [1, 1]} : vector<544x2xf32> to vector<544x1xf32>
    %cst_6 = arith.constant 9.99999974E-6 : f32
    %15 = vector.broadcast %cst_6 : f32 to vector<544x1xf32>
    %16 = arith.addf %11, %15 : vector<544x1xf32>
    %17 = math.rsqrt %16 : vector<544x1xf32>
    %18 = arith.mulf %13, %17 : vector<544x1xf32>
    %19 = arith.mulf %7, %18 : vector<544x1xf32>
    %20 = arith.subf %14, %19 : vector<544x1xf32>
    %21 = vector.broadcast %18 : vector<544x1xf32> to vector<544x196xf32>
    %22 = arith.mulf %0, %21 : vector<544x196xf32>
    %23 = vector.broadcast %20 : vector<544x1xf32> to vector<544x196xf32>
    %24 = arith.addf %22, %23 : vector<544x196xf32>
    %cst_7 = arith.constant 0.000000e+00 : f32
    %25 = vector.broadcast %cst_7 : f32 to vector<544x196xf32>
    %26 = arith.maximumf %24, %25 : vector<544x196xf32>
    %c0_8 = arith.constant 0 : index
    %c0_9 = arith.constant 0 : index
    %27 = vector.load %arg3[%c0_8, %c0_9] : memref<544x196xf32, #tpu.memory_space<vmem>>, vector<544x196xf32>
    tpu.vector_store %arg3[%c0_8, %c0_9], %26 {strides = array<i32>} : memref<544x196xf32, #tpu.memory_space<vmem>>, vector<544x196xf32>,
    return
  }
  func.func @transform_0(%arg0: i32) -> (i32, i32) {
    %c0_i32 = arith.constant 0 : i32
    %c0_i32_0 = arith.constant 0 : i32
    return %arg0, %c0_i32 : i32, i32
  }
  func.func @transform_1(%arg0: i32) -> (i32, i32) {
    %c0_i32 = arith.constant 0 : i32
    %c0_i32_0 = arith.constant 0 : i32
    return %arg0, %c0_i32 : i32, i32
  }
  func.func @transform_2(%arg0: i32) -> (i32, i32) {
    %c0_i32 = arith.constant 0 : i32
    %c0_i32_0 = arith.constant 0 : i32
    return %arg0, %c0_i32 : i32, i32
  }
}

</mosaic_0001>

<llo_original>
// kernel: tpu_custom_call.1
$region0: #{tpu_custom_call.1}
  #allocation0 [shape = 'u32[]', space=smem, size = 0x4, offset = 0x4, fixed_abs, tag = 'smem constant byte address 0x4 - core index']
  #allocation1 [shape = 'u32[144,128]{1,0:T(1,128)}', space=vmem, size = 0x12000, scoped, tag = 'internal scratch']
  %s0 = inlined_call_operand.vmem [shape: f32[1088,196], index: 0, kind: input, shape index: {}]
  %s1 = inlined_call_operand.vmem [shape: f32[1088,2], index: 1, kind: input, shape index: {}]
  %s2 = inlined_call_operand.vmem [shape: f32[1088,196], index: 2, kind: output, shape index: {}]
  %s3 = sld [smem:[#allocation0]]
  $region41: #{tpu_custom_call.1} parent=0
    _
  %s5 = ssub.s32 1, %s3
  %s6 = scalar_select 0, %s5, %s3
  loop: start=0, step=1, limit=4
  $region2: #{tpu_custom_call.1} parent=0 // loop_pre_header
    _
  $region3: #{tpu_custom_call.1} parent=0 // loop_header
    %s8 = sphi 0, %s12
    %p9 = scmp.ge.s32.totalorder %s8, 4
    %s18 = sphi 0, %s20
    %s21 = sphi 0, %s18
    %s22 = sphi 0, %s21
    %s38 = sphi 0, %s22
    %s44 = sphi 0, %s46
    %s47 = sphi 0, %s44
    %s48 = sphi 0, %s47
    %s64 = sphi 0, %s48
    %s70 = sphi 0, %s72
    %s73 = sphi 0, %s70
    %s74 = sphi 0, %s73
    %s90 = sphi 0, %s74
  $region4: #{tpu_custom_call.1} parent=0 // loop_header_branch
    %11 = sbr.rel (%p9) target = $region8
  $region5: #{tpu_custom_call.1} parent=0 // loop_body
    %s13 = ssub.s32 %s8, 1
    %s14 = ssub.s32 %s8, 2
    %s15 = sadd.s32 %s8, 1
    %s16 = ssub.s32 %s8, %s15
    %p17 = scmp.eq.s32.totalorder %s16, 0
    %s19 = sadd.s32 %s18, 1
    %s20 = scalar_select %p17, %s18, %s19
    %p23 = pneg %p17
    %p24 = scmp.eq.s32.totalorder %s8, 1
    %p25 = por %p23, %p24
    %p26 = scmp.ne.s32.totalorder %s18, %s21
    %p27 = scmp.eq.s32.totalorder %s8, 0
    %p28 = por %p26, %p27
    %p29 = scmp.ne.s32.totalorder %s18, %s21
    %p30 = scmp.eq.s32.totalorder %s13, 1
    %p31 = por %p29, %p30
    %p32 = scmp.ne.s32.totalorder %s21, %s22
    %p33 = scmp.eq.s32.totalorder %s13, 0
    %p34 = por %p32, %p33
    %p35 = scmp.ne.s32.totalorder %s21, %s22
    %p36 = scmp.eq.s32.totalorder %s14, 1
    %p37 = por %p35, %p36
    %p39 = scmp.ne.s32.totalorder %s22, %s38
    %p40 = scmp.eq.s32.totalorder %s14, 0
    %p41 = por %p39, %p40
    %s42 = ssub.s32 %s8, %s15
    %p43 = scmp.eq.s32.totalorder %s42, 0
    %s45 = sadd.s32 %s44, 1
    %s46 = scalar_select %p43, %s44, %s45
    %p49 = pneg %p43
    %p50 = scmp.eq.s32.totalorder %s8, 1
    %p51 = por %p49, %p50
    %p52 = scmp.ne.s32.totalorder %s44, %s47
    %p53 = scmp.eq.s32.totalorder %s8, 0
    %p54 = por %p52, %p53
    %p55 = scmp.ne.s32.totalorder %s44, %s47
    %p56 = scmp.eq.s32.totalorder %s13, 1
    %p57 = por %p55, %p56
    %p58 = scmp.ne.s32.totalorder %s47, %s48
    %p59 = scmp.eq.s32.totalorder %s13, 0
    %p60 = por %p58, %p59
    %p61 = scmp.ne.s32.totalorder %s47, %s48
    %p62 = scmp.eq.s32.totalorder %s14, 1
    %p63 = por %p61, %p62
    %p65 = scmp.ne.s32.totalorder %s48, %s64
    %p66 = scmp.eq.s32.totalorder %s14, 0
    %p67 = por %p65, %p66
    %s68 = ssub.s32 %s8, %s15
    %p69 = scmp.eq.s32.totalorder %s68, 0
    %s71 = sadd.s32 %s70, 1
    %s72 = scalar_select %p69, %s70, %s71
    %p75 = pneg %p69
    %p76 = scmp.eq.s32.totalorder %s8, 1
    %p77 = por %p75, %p76
    %p78 = scmp.ne.s32.totalorder %s70, %s73
    %p79 = scmp.eq.s32.totalorder %s8, 0
    %p80 = por %p78, %p79
    %p81 = scmp.ne.s32.totalorder %s70, %s73
    %p82 = scmp.eq.s32.totalorder %s13, 1
    %p83 = por %p81, %p82
    %p84 = scmp.ne.s32.totalorder %s73, %s74
    %p85 = scmp.eq.s32.totalorder %s13, 0
    %p86 = por %p84, %p85
    %p87 = scmp.ne.s32.totalorder %s73, %s74
    %p88 = scmp.eq.s32.totalorder %s14, 1
    %p89 = por %p87, %p88
    %p91 = scmp.ne.s32.totalorder %s74, %s90
    %p92 = scmp.eq.s32.totalorder %s14, 0
    %p93 = por %p91, %p92
    %p94 = scmp.le.s32.totalorder 1, %s8
    %p95 = scmp.lt.s32.totalorder %s8, 3
    %p96 = pnand %p94, %p95
    %p97 = pneg %p96
    // Predicated region
    $region9: #{tpu_custom_call.1} parent=5 // pred_check
      _
    $region10: #{tpu_custom_call.1} parent=5 // pred_check_branch
      %99 = sbr.rel (%p96) target = $region12
    $region11: #{tpu_custom_call.1} parent=5 // pred_region
      %s100 = ssub.s32 %s8, 1
    $region12: #{tpu_custom_call.1} parent=5 // pred_fallthru
      _
    %p101 = scmp.lt.s32.totalorder %s8, 2
    // Predicated region
    $region13: #{tpu_custom_call.1} parent=5 // pred_check
      %p102 = pneg %p101
    $region14: #{tpu_custom_call.1} parent=5 // pred_check_branch
      %104 = sbr.rel (%p102) target = $region16
    $region15: #{tpu_custom_call.1} parent=5 // pred_region
      // Predicated region
      $region17: #{tpu_custom_call.1} parent=15 // pred_check
        %p105 = pneg %p28
      $region18: #{tpu_custom_call.1} parent=15 // pred_check_branch
        %107 = sbr.rel (%p105) target = $region20
      $region19: #{tpu_custom_call.1} parent=15 // pred_region
        %s108 = smul.u32 68, %s8
        %p109 = scmp.lt.s32.totalorder %s108, 135
        %s110 = scalar_select %p109, %s108, 135
        %s111 = smul.addr %s110, 2
        %s112 = smul.addr %s111, 8
        %s113 = scalar_lea.vmem %s0, %s112
        %s114 = smul.u32 68, %s8
      $region20: #{tpu_custom_call.1} parent=15 // pred_fallthru
        _
      // Predicated region
      $region21: #{tpu_custom_call.1} parent=15 // pred_check
        %p115 = pneg %p54
      $region22: #{tpu_custom_call.1} parent=15 // pred_check_branch
        %117 = sbr.rel (%p115) target = $region24
      $region23: #{tpu_custom_call.1} parent=15 // pred_region
        %s118 = smul.u32 68, %s8
        %p119 = scmp.lt.s32.totalorder %s118, 135
        %s120 = scalar_select %p119, %s118, 135
        %s121 = smul.addr %s120, 8
        %s122 = scalar_lea.vmem %s1, %s121
        %s123 = smul.u32 68, %s8
      $region24: #{tpu_custom_call.1} parent=15 // pred_fallthru
        _
    $region16: #{tpu_custom_call.1} parent=5 // pred_fallthru
      _
    %p124 = scmp.le.s32.totalorder 1, %s8
    %p125 = scmp.lt.s32.totalorder %s8, 3
    %p126 = pnand %p124, %p125
    %p127 = pneg %p126
    // Predicated region
    $region25: #{tpu_custom_call.1} parent=5 // pred_check
      _
    $region26: #{tpu_custom_call.1} parent=5 // pred_check_branch
      %129 = sbr.rel (%p126) target = $region28
    $region27: #{tpu_custom_call.1} parent=5 // pred_region
      %s130 = ssub.s32 %s8, 1
      %s131 = smul.u32 68, %s13
      %p132 = scmp.lt.s32.totalorder %s131, 135
      %s133 = scalar_select %p132, %s131, 135
      %s134 = smul.addr %s133, 2
      %s135 = smul.addr %s134, 8
      %s136 = scalar_lea.vmem %s0, %s135
      %p137 = pneg %p34
      %p138 = pneg %p31
      %s139 = smul.u32 68, %s13
      %p140 = scmp.lt.s32.totalorder %s139, 135
      %s141 = scalar_select %p140, %s139, 135
      %s142 = smul.addr %s141, 8
      %s143 = scalar_lea.vmem %s1, %s142
      %p144 = pneg %p60
      %p145 = pneg %p57
      %p146 = pneg %p86
      %p147 = pneg %p83
      %s148 = smul.u32 68, %s13
      %p149 = scmp.lt.s32.totalorder %s148, 135
      %s150 = scalar_select %p149, %s148, 135
      %s151 = smul.addr %s150, 2
      %s152 = smul.addr %s151, 8
      %s153 = scalar_lea.vmem %s2, %s152
      %s154 = smul.u32 68, %s13
      %p155 = scmp.lt.s32.totalorder %s154, 135
      %s156 = scalar_select %p155, %s154, 135
      %s157 = smul.addr %s156, 2
      %s158 = smul.addr %s157, 8
      %s159 = scalar_lea.vmem %s0, %s158
      %s160 = smul.u32 68, %s13
      %s161 = smul.u32 68, %s13
      %p162 = scmp.lt.s32.totalorder %s161, 135
      %s163 = scalar_select %p162, %s161, 135
      %s164 = smul.addr %s163, 8
      %s165 = scalar_lea.vmem %s1, %s164
      %s166 = smul.u32 68, %s13
      %s167 = smul.u32 68, %s13
      %p168 = scmp.lt.s32.totalorder %s167, 135
      %s169 = scalar_select %p168, %s167, 135
      %s170 = smul.addr %s169, 2
      %s171 = smul.addr %s170, 8
      %s172 = scalar_lea.vmem %s2, %s171
      %s173 = smul.u32 68, %s13
      %v174 = vld [vmem:[%s159] sm:$0xff]
      %v175 = vld [vmem:[%s159 + $0x8] sm:$0xff]
      %v176 = vld [vmem:[%s159 + $0x10] sm:$0xff]
      %v177 = vld [vmem:[%s159 + $0x18] sm:$0xff]
      %v178 = vld [vmem:[%s159 + $0x20] sm:$0xff]
      %v179 = vld [vmem:[%s159 + $0x28] sm:$0xff]
      %v180 = vld [vmem:[%s159 + $0x30] sm:$0xff]
      %v181 = vld [vmem:[%s159 + $0x38] sm:$0xff]
      %v182 = vld [vmem:[%s159 + $0x40] sm:$0xff]
      %v183 = vld [vmem:[%s159 + $0x48] sm:$0xff]
      %v184 = vld [vmem:[%s159 + $0x50] sm:$0xff]
      %v185 = vld [vmem:[%s159 + $0x58] sm:$0xff]
      %v186 = vld [vmem:[%s159 + $0x60] sm:$0xff]
      %v187 = vld [vmem:[%s159 + $0x68] sm:$0xff]
      %v188 = vld [vmem:[%s159 + $0x70] sm:$0xff]
      %v189 = vld [vmem:[%s159 + $0x78] sm:$0xff]
      %v190 = vld [vmem:[%s159 + $0x80] sm:$0xff]
      %v191 = vld [vmem:[%s159 + $0x88] sm:$0xff]
      %v192 = vld [vmem:[%s159 + $0x90] sm:$0xff]
      %v193 = vld [vmem:[%s159 + $0x98] sm:$0xff]
      %v194 = vld [vmem:[%s159 + $0xa0] sm:$0xff]
      %v195 = vld [vmem:[%s159 + $0xa8] sm:$0xff]
      %v196 = vld [vmem:[%s159 + $0xb0] sm:$0xff]
      %v197 = vld [vmem:[%s159 + $0xb8] sm:$0xff]
      %v198 = vld [vmem:[%s159 + $0xc0] sm:$0xff]
      %v199 = vld [vmem:[%s159 + $0xc8] sm:$0xff]
      %v200 = vld [vmem:[%s159 + $0xd0] sm:$0xff]
      %v201 = vld [vmem:[%s159 + $0xd8] sm:$0xff]
      %v202 = vld [vmem:[%s159 + $0xe0] sm:$0xff]
      %v203 = vld [vmem:[%s159 + $0xe8] sm:$0xff]
      %v204 = vld [vmem:[%s159 + $0xf0] sm:$0xff]
      %v205 = vld [vmem:[%s159 + $0xf8] sm:$0xff]
      %v206 = vld [vmem:[%s159 + $0x100] sm:$0xff]
      %v207 = vld [vmem:[%s159 + $0x108] sm:$0xff]
      %v208 = vld [vmem:[%s159 + $0x110] sm:$0xff]
      %v209 = vld [vmem:[%s159 + $0x118] sm:$0xff]
      %v210 = vld [vmem:[%s159 + $0x120] sm:$0xff]
      %v211 = vld [vmem:[%s159 + $0x128] sm:$0xff]
      %v212 = vld [vmem:[%s159 + $0x130] sm:$0xff]
      %v213 = vld [vmem:[%s159 + $0x138] sm:$0xff]
      %v214 = vld [vmem:[%s159 + $0x140] sm:$0xff]
      %v215 = vld [vmem:[%s159 + $0x148] sm:$0xff]
      %v216 = vld [vmem:[%s159 + $0x150] sm:$0xff]
      %v217 = vld [vmem:[%s159 + $0x158] sm:$0xff]
      %v218 = vld [vmem:[%s159 + $0x160] sm:$0xff]
      %v219 = vld [vmem:[%s159 + $0x168] sm:$0xff]
      %v220 = vld [vmem:[%s159 + $0x170] sm:$0xff]
      %v221 = vld [vmem:[%s159 + $0x178] sm:$0xff]
      %v222 = vld [vmem:[%s159 + $0x180] sm:$0xff]
      %v223 = vld [vmem:[%s159 + $0x188] sm:$0xff]
      %v224 = vld [vmem:[%s159 + $0x190] sm:$0xff]
      %v225 = vld [vmem:[%s159 + $0x198] sm:$0xff]
      %v226 = vld [vmem:[%s159 + $0x1a0] sm:$0xff]
      %v227 = vld [vmem:[%s159 + $0x1a8] sm:$0xff]
      %v228 = vld [vmem:[%s159 + $0x1b0] sm:$0xff]
      %v229 = vld [vmem:[%s159 + $0x1b8] sm:$0xff]
      %v230 = vld [vmem:[%s159 + $0x1c0] sm:$0xff]
      %v231 = vld [vmem:[%s159 + $0x1c8] sm:$0xff]
      %v232 = vld [vmem:[%s159 + $0x1d0] sm:$0xff]
      %v233 = vld [vmem:[%s159 + $0x1d8] sm:$0xff]
      %v234 = vld [vmem:[%s159 + $0x1e0] sm:$0xff]
      %v235 = vld [vmem:[%s159 + $0x1e8] sm:$0xff]
      %v236 = vld [vmem:[%s159 + $0x1f0] sm:$0xff]
      %v237 = vld [vmem:[%s159 + $0x1f8] sm:$0xff]
      %v238 = vld [vmem:[%s159 + $0x200] sm:$0xff]
      %v239 = vld [vmem:[%s159 + $0x208] sm:$0xff]
      %v240 = vld [vmem:[%s159 + $0x210] sm:$0xff]
      %v241 = vld [vmem:[%s159 + $0x218] sm:$0xff]
      %v242 = vld [vmem:[%s159 + $0x220] sm:$0xff]
      %v243 = vld [vmem:[%s159 + $0x228] sm:$0xff]
      %v244 = vld [vmem:[%s159 + $0x230] sm:$0xff]
      %v245 = vld [vmem:[%s159 + $0x238] sm:$0xff]
      %v246 = vld [vmem:[%s159 + $0x240] sm:$0xff]
      %v247 = vld [vmem:[%s159 + $0x248] sm:$0xff]
      %v248 = vld [vmem:[%s159 + $0x250] sm:$0xff]
      %v249 = vld [vmem:[%s159 + $0x258] sm:$0xff]
      %v250 = vld [vmem:[%s159 + $0x260] sm:$0xff]
      %v251 = vld [vmem:[%s159 + $0x268] sm:$0xff]
      %v252 = vld [vmem:[%s159 + $0x270] sm:$0xff]
      %v253 = vld [vmem:[%s159 + $0x278] sm:$0xff]
      %v254 = vld [vmem:[%s159 + $0x280] sm:$0xff]
      %v255 = vld [vmem:[%s159 + $0x288] sm:$0xff]
      %v256 = vld [vmem:[%s159 + $0x290] sm:$0xff]
      %v257 = vld [vmem:[%s159 + $0x298] sm:$0xff]
      %v258 = vld [vmem:[%s159 + $0x2a0] sm:$0xff]
      %v259 = vld [vmem:[%s159 + $0x2a8] sm:$0xff]
      %v260 = vld [vmem:[%s159 + $0x2b0] sm:$0xff]
      %v261 = vld [vmem:[%s159 + $0x2b8] sm:$0xff]
      %v262 = vld [vmem:[%s159 + $0x2c0] sm:$0xff]
      %v263 = vld [vmem:[%s159 + $0x2c8] sm:$0xff]
      %v264 = vld [vmem:[%s159 + $0x2d0] sm:$0xff]
      %v265 = vld [vmem:[%s159 + $0x2d8] sm:$0xff]
      %v266 = vld [vmem:[%s159 + $0x2e0] sm:$0xff]
      %v267 = vld [vmem:[%s159 + $0x2e8] sm:$0xff]
      %v268 = vld [vmem:[%s159 + $0x2f0] sm:$0xff]
      %v269 = vld [vmem:[%s159 + $0x2f8] sm:$0xff]
      %v270 = vld [vmem:[%s159 + $0x300] sm:$0xff]
      %v271 = vld [vmem:[%s159 + $0x308] sm:$0xff]
      %v272 = vld [vmem:[%s159 + $0x310] sm:$0xff]
      %v273 = vld [vmem:[%s159 + $0x318] sm:$0xff]
      %v274 = vld [vmem:[%s159 + $0x320] sm:$0xff]
      %v275 = vld [vmem:[%s159 + $0x328] sm:$0xff]
      %v276 = vld [vmem:[%s159 + $0x330] sm:$0xff]
      %v277 = vld [vmem:[%s159 + $0x338] sm:$0xff]
      %v278 = vld [vmem:[%s159 + $0x340] sm:$0xff]
      %v279 = vld [vmem:[%s159 + $0x348] sm:$0xff]
      %v280 = vld [vmem:[%s159 + $0x350] sm:$0xff]
      %v281 = vld [vmem:[%s159 + $0x358] sm:$0xff]
      %v282 = vld [vmem:[%s159 + $0x360] sm:$0xff]
      %v283 = vld [vmem:[%s159 + $0x368] sm:$0xff]
      %v284 = vld [vmem:[%s159 + $0x370] sm:$0xff]
      %v285 = vld [vmem:[%s159 + $0x378] sm:$0xff]
      %v286 = vld [vmem:[%s159 + $0x380] sm:$0xff]
      %v287 = vld [vmem:[%s159 + $0x388] sm:$0xff]
      %v288 = vld [vmem:[%s159 + $0x390] sm:$0xff]
      %v289 = vld [vmem:[%s159 + $0x398] sm:$0xff]
      %v290 = vld [vmem:[%s159 + $0x3a0] sm:$0xff]
      %v291 = vld [vmem:[%s159 + $0x3a8] sm:$0xff]
      %v292 = vld [vmem:[%s159 + $0x3b0] sm:$0xff]
      %v293 = vld [vmem:[%s159 + $0x3b8] sm:$0xff]
      %v294 = vld [vmem:[%s159 + $0x3c0] sm:$0xff]
      %v295 = vld [vmem:[%s159 + $0x3c8] sm:$0xff]
      %v296 = vld [vmem:[%s159 + $0x3d0] sm:$0xff]
      %v297 = vld [vmem:[%s159 + $0x3d8] sm:$0xff]
      %v298 = vld [vmem:[%s159 + $0x3e0] sm:$0xff]
      %v299 = vld [vmem:[%s159 + $0x3e8] sm:$0xff]
      %v300 = vld [vmem:[%s159 + $0x3f0] sm:$0xff]
      %v301 = vld [vmem:[%s159 + $0x3f8] sm:$0xff]
      %v302 = vld [vmem:[%s159 + $0x400] sm:$0xff]
      %v303 = vld [vmem:[%s159 + $0x408] sm:$0xff]
      %v304 = vld [vmem:[%s159 + $0x410] sm:$0xff]
      %v305 = vld [vmem:[%s159 + $0x418] sm:$0xff]
      %v306 = vld [vmem:[%s159 + $0x420] sm:$0xff]
      %v307 = vld [vmem:[%s159 + $0x428] sm:$0xff]
      %v308 = vld [vmem:[%s159 + $0x430] sm:$0xff]
      %v309 = vld [vmem:[%s159 + $0x438] sm:$0xff]
      %vm310 = vcmask 556032
      %v311 = vsel %vm310, %v175, 0.0
      %v312 = vadd.f32 %v174, %v311
      %313 = vadd.xlane.f32.xlu0 %v312
      %v314 = vpop.xlane.xlu0 %313
      %v315 = vsel %vm310, %v177, 0.0
      %v316 = vadd.f32 %v176, %v315
      %317 = vadd.xlane.f32.xlu0 %v316
      %v318 = vpop.xlane.xlu0 %317
      %v319 = vsel %vm310, %v179, 0.0
      %v320 = vadd.f32 %v178, %v319
      %321 = vadd.xlane.f32.xlu0 %v320
      %v322 = vpop.xlane.xlu0 %321
      %v323 = vsel %vm310, %v181, 0.0
      %v324 = vadd.f32 %v180, %v323
      %325 = vadd.xlane.f32.xlu0 %v324
      %v326 = vpop.xlane.xlu0 %325
      %v327 = vsel %vm310, %v183, 0.0
      %v328 = vadd.f32 %v182, %v327
      %329 = vadd.xlane.f32.xlu0 %v328
      %v330 = vpop.xlane.xlu0 %329
      %v331 = vsel %vm310, %v185, 0.0
      %v332 = vadd.f32 %v184, %v331
      %333 = vadd.xlane.f32.xlu0 %v332
      %v334 = vpop.xlane.xlu0 %333
      %v335 = vsel %vm310, %v187, 0.0
      %v336 = vadd.f32 %v186, %v335
      %337 = vadd.xlane.f32.xlu0 %v336
      %v338 = vpop.xlane.xlu0 %337
      %v339 = vsel %vm310, %v189, 0.0
      %v340 = vadd.f32 %v188, %v339
      %341 = vadd.xlane.f32.xlu0 %v340
      %v342 = vpop.xlane.xlu0 %341
      %v343 = vsel %vm310, %v191, 0.0
      %v344 = vadd.f32 %v190, %v343
      %345 = vadd.xlane.f32.xlu0 %v344
      %v346 = vpop.xlane.xlu0 %345
      %v347 = vsel %vm310, %v193, 0.0
      %v348 = vadd.f32 %v192, %v347
      %349 = vadd.xlane.f32.xlu0 %v348
      %v350 = vpop.xlane.xlu0 %349
      %v351 = vsel %vm310, %v195, 0.0
      %v352 = vadd.f32 %v194, %v351
      %353 = vadd.xlane.f32.xlu0 %v352
      %v354 = vpop.xlane.xlu0 %353
      %v355 = vsel %vm310, %v197, 0.0
      %v356 = vadd.f32 %v196, %v355
      %357 = vadd.xlane.f32.xlu0 %v356
      %v358 = vpop.xlane.xlu0 %357
      %v359 = vsel %vm310, %v199, 0.0
      %v360 = vadd.f32 %v198, %v359
      %361 = vadd.xlane.f32.xlu0 %v360
      %v362 = vpop.xlane.xlu0 %361
      %v363 = vsel %vm310, %v201, 0.0
      %v364 = vadd.f32 %v200, %v363
      %365 = vadd.xlane.f32.xlu0 %v364
      %v366 = vpop.xlane.xlu0 %365
      %v367 = vsel %vm310, %v203, 0.0
      %v368 = vadd.f32 %v202, %v367
      %369 = vadd.xlane.f32.xlu0 %v368
      %v370 = vpop.xlane.xlu0 %369
      %v371 = vsel %vm310, %v205, 0.0
      %v372 = vadd.f32 %v204, %v371
      %373 = vadd.xlane.f32.xlu0 %v372
      %v374 = vpop.xlane.xlu0 %373
      %v375 = vsel %vm310, %v207, 0.0
      %v376 = vadd.f32 %v206, %v375
      %377 = vadd.xlane.f32.xlu0 %v376
      %v378 = vpop.xlane.xlu0 %377
      %v379 = vsel %vm310, %v209, 0.0
      %v380 = vadd.f32 %v208, %v379
      %381 = vadd.xlane.f32.xlu0 %v380
      %v382 = vpop.xlane.xlu0 %381
      %v383 = vsel %vm310, %v211, 0.0
      %v384 = vadd.f32 %v210, %v383
      %385 = vadd.xlane.f32.xlu0 %v384
      %v386 = vpop.xlane.xlu0 %385
      %v387 = vsel %vm310, %v213, 0.0
      %v388 = vadd.f32 %v212, %v387
      %389 = vadd.xlane.f32.xlu0 %v388
      %v390 = vpop.xlane.xlu0 %389
      %v391 = vsel %vm310, %v215, 0.0
      %v392 = vadd.f32 %v214, %v391
      %393 = vadd.xlane.f32.xlu0 %v392
      %v394 = vpop.xlane.xlu0 %393
      %v395 = vsel %vm310, %v217, 0.0
      %v396 = vadd.f32 %v216, %v395
      %397 = vadd.xlane.f32.xlu0 %v396
      %v398 = vpop.xlane.xlu0 %397
      %v399 = vsel %vm310, %v219, 0.0
      %v400 = vadd.f32 %v218, %v399
      %401 = vadd.xlane.f32.xlu0 %v400
      %v402 = vpop.xlane.xlu0 %401
      %v403 = vsel %vm310, %v221, 0.0
      %v404 = vadd.f32 %v220, %v403
      %405 = vadd.xlane.f32.xlu0 %v404
      %v406 = vpop.xlane.xlu0 %405
      %v407 = vsel %vm310, %v223, 0.0
      %v408 = vadd.f32 %v222, %v407
      %409 = vadd.xlane.f32.xlu0 %v408
      %v410 = vpop.xlane.xlu0 %409
      %v411 = vsel %vm310, %v225, 0.0
      %v412 = vadd.f32 %v224, %v411
      %413 = vadd.xlane.f32.xlu0 %v412
      %v414 = vpop.xlane.xlu0 %413
      %v415 = vsel %vm310, %v227, 0.0
      %v416 = vadd.f32 %v226, %v415
      %417 = vadd.xlane.f32.xlu0 %v416
      %v418 = vpop.xlane.xlu0 %417
      %v419 = vsel %vm310, %v229, 0.0
      %v420 = vadd.f32 %v228, %v419
      %421 = vadd.xlane.f32.xlu0 %v420
      %v422 = vpop.xlane.xlu0 %421
      %v423 = vsel %vm310, %v231, 0.0
      %v424 = vadd.f32 %v230, %v423
      %425 = vadd.xlane.f32.xlu0 %v424
      %v426 = vpop.xlane.xlu0 %425
      %v427 = vsel %vm310, %v233, 0.0
      %v428 = vadd.f32 %v232, %v427
      %429 = vadd.xlane.f32.xlu0 %v428
      %v430 = vpop.xlane.xlu0 %429
      %v431 = vsel %vm310, %v235, 0.0
      %v432 = vadd.f32 %v234, %v431
      %433 = vadd.xlane.f32.xlu0 %v432
      %v434 = vpop.xlane.xlu0 %433
      %v435 = vsel %vm310, %v237, 0.0
      %v436 = vadd.f32 %v236, %v435
      %437 = vadd.xlane.f32.xlu0 %v436
      %v438 = vpop.xlane.xlu0 %437
      %v439 = vsel %vm310, %v239, 0.0
      %v440 = vadd.f32 %v238, %v439
      %441 = vadd.xlane.f32.xlu0 %v440
      %v442 = vpop.xlane.xlu0 %441
      %v443 = vsel %vm310, %v241, 0.0
      %v444 = vadd.f32 %v240, %v443
      %445 = vadd.xlane.f32.xlu0 %v444
      %v446 = vpop.xlane.xlu0 %445
      %v447 = vsel %vm310, %v243, 0.0
      %v448 = vadd.f32 %v242, %v447
      %449 = vadd.xlane.f32.xlu0 %v448
      %v450 = vpop.xlane.xlu0 %449
      %v451 = vsel %vm310, %v245, 0.0
      %v452 = vadd.f32 %v244, %v451
      %453 = vadd.xlane.f32.xlu0 %v452
      %v454 = vpop.xlane.xlu0 %453
      %v455 = vsel %vm310, %v247, 0.0
      %v456 = vadd.f32 %v246, %v455
      %457 = vadd.xlane.f32.xlu0 %v456
      %v458 = vpop.xlane.xlu0 %457
      %v459 = vsel %vm310, %v249, 0.0
      %v460 = vadd.f32 %v248, %v459
      %461 = vadd.xlane.f32.xlu0 %v460
      %v462 = vpop.xlane.xlu0 %461
      %v463 = vsel %vm310, %v251, 0.0
      %v464 = vadd.f32 %v250, %v463
      %465 = vadd.xlane.f32.xlu0 %v464
      %v466 = vpop.xlane.xlu0 %465
      %v467 = vsel %vm310, %v253, 0.0
      %v468 = vadd.f32 %v252, %v467
      %469 = vadd.xlane.f32.xlu0 %v468
      %v470 = vpop.xlane.xlu0 %469
      %v471 = vsel %vm310, %v255, 0.0
      %v472 = vadd.f32 %v254, %v471
      %473 = vadd.xlane.f32.xlu0 %v472
      %v474 = vpop.xlane.xlu0 %473
      %v475 = vsel %vm310, %v257, 0.0
      %v476 = vadd.f32 %v256, %v475
      %477 = vadd.xlane.f32.xlu0 %v476
      %v478 = vpop.xlane.xlu0 %477
      %v479 = vsel %vm310, %v259, 0.0
      %v480 = vadd.f32 %v258, %v479
      %481 = vadd.xlane.f32.xlu0 %v480
      %v482 = vpop.xlane.xlu0 %481
      %v483 = vsel %vm310, %v261, 0.0
      %v484 = vadd.f32 %v260, %v483
      %485 = vadd.xlane.f32.xlu0 %v484
      %v486 = vpop.xlane.xlu0 %485
      %v487 = vsel %vm310, %v263, 0.0
      %v488 = vadd.f32 %v262, %v487
      %489 = vadd.xlane.f32.xlu0 %v488
      %v490 = vpop.xlane.xlu0 %489
      %v491 = vsel %vm310, %v265, 0.0
      %v492 = vadd.f32 %v264, %v491
      %493 = vadd.xlane.f32.xlu0 %v492
      %v494 = vpop.xlane.xlu0 %493
      %v495 = vsel %vm310, %v267, 0.0
      %v496 = vadd.f32 %v266, %v495
      %497 = vadd.xlane.f32.xlu0 %v496
      %v498 = vpop.xlane.xlu0 %497
      %v499 = vsel %vm310, %v269, 0.0
      %v500 = vadd.f32 %v268, %v499
      %501 = vadd.xlane.f32.xlu0 %v500
      %v502 = vpop.xlane.xlu0 %501
      %v503 = vsel %vm310, %v271, 0.0
      %v504 = vadd.f32 %v270, %v503
      %505 = vadd.xlane.f32.xlu0 %v504
      %v506 = vpop.xlane.xlu0 %505
      %v507 = vsel %vm310, %v273, 0.0
      %v508 = vadd.f32 %v272, %v507
      %509 = vadd.xlane.f32.xlu0 %v508
      %v510 = vpop.xlane.xlu0 %509
      %v511 = vsel %vm310, %v275, 0.0
      %v512 = vadd.f32 %v274, %v511
      %513 = vadd.xlane.f32.xlu0 %v512
      %v514 = vpop.xlane.xlu0 %513
      %v515 = vsel %vm310, %v277, 0.0
      %v516 = vadd.f32 %v276, %v515
      %517 = vadd.xlane.f32.xlu0 %v516
      %v518 = vpop.xlane.xlu0 %517
      %v519 = vsel %vm310, %v279, 0.0
      %v520 = vadd.f32 %v278, %v519
      %521 = vadd.xlane.f32.xlu0 %v520
      %v522 = vpop.xlane.xlu0 %521
      %v523 = vsel %vm310, %v281, 0.0
      %v524 = vadd.f32 %v280, %v523
      %525 = vadd.xlane.f32.xlu0 %v524
      %v526 = vpop.xlane.xlu0 %525
      %v527 = vsel %vm310, %v283, 0.0
      %v528 = vadd.f32 %v282, %v527
      %529 = vadd.xlane.f32.xlu0 %v528
      %v530 = vpop.xlane.xlu0 %529
      %v531 = vsel %vm310, %v285, 0.0
      %v532 = vadd.f32 %v284, %v531
      %533 = vadd.xlane.f32.xlu0 %v532
      %v534 = vpop.xlane.xlu0 %533
      %v535 = vsel %vm310, %v287, 0.0
      %v536 = vadd.f32 %v286, %v535
      %537 = vadd.xlane.f32.xlu0 %v536
      %v538 = vpop.xlane.xlu0 %537
      %v539 = vsel %vm310, %v289, 0.0
      %v540 = vadd.f32 %v288, %v539
      %541 = vadd.xlane.f32.xlu0 %v540
      %v542 = vpop.xlane.xlu0 %541
      %v543 = vsel %vm310, %v291, 0.0
      %v544 = vadd.f32 %v290, %v543
      %545 = vadd.xlane.f32.xlu0 %v544
      %v546 = vpop.xlane.xlu0 %545
      %v547 = vsel %vm310, %v293, 0.0
      %v548 = vadd.f32 %v292, %v547
      %549 = vadd.xlane.f32.xlu0 %v548
      %v550 = vpop.xlane.xlu0 %549
      %v551 = vsel %vm310, %v295, 0.0
      %v552 = vadd.f32 %v294, %v551
      %553 = vadd.xlane.f32.xlu0 %v552
      %v554 = vpop.xlane.xlu0 %553
      %v555 = vsel %vm310, %v297, 0.0
      %v556 = vadd.f32 %v296, %v555
      %557 = vadd.xlane.f32.xlu0 %v556
      %v558 = vpop.xlane.xlu0 %557
      %v559 = vsel %vm310, %v299, 0.0
      %v560 = vadd.f32 %v298, %v559
      %561 = vadd.xlane.f32.xlu0 %v560
      %v562 = vpop.xlane.xlu0 %561
      %v563 = vsel %vm310, %v301, 0.0
      %v564 = vadd.f32 %v300, %v563
      %565 = vadd.xlane.f32.xlu0 %v564
      %v566 = vpop.xlane.xlu0 %565
      %v567 = vsel %vm310, %v303, 0.0
      %v568 = vadd.f32 %v302, %v567
      %569 = vadd.xlane.f32.xlu0 %v568
      %v570 = vpop.xlane.xlu0 %569
      %v571 = vsel %vm310, %v305, 0.0
      %v572 = vadd.f32 %v304, %v571
      %573 = vadd.xlane.f32.xlu0 %v572
      %v574 = vpop.xlane.xlu0 %573
      %v575 = vsel %vm310, %v307, 0.0
      %v576 = vadd.f32 %v306, %v575
      %577 = vadd.xlane.f32.xlu0 %v576
      %v578 = vpop.xlane.xlu0 %577
      %v579 = vsel %vm310, %v309, 0.0
      %v580 = vadd.f32 %v308, %v579
      %581 = vadd.xlane.f32.xlu0 %v580
      %v582 = vpop.xlane.xlu0 %581
      %v583 = vmul.f32 %v174, %v174
      %v584 = vmul.f32 %v175, %v175
      %v585 = vmul.f32 %v176, %v176
      %v586 = vmul.f32 %v177, %v177
      %v587 = vmul.f32 %v178, %v178
      %v588 = vmul.f32 %v179, %v179
      %v589 = vmul.f32 %v180, %v180
      %v590 = vmul.f32 %v181, %v181
      %v591 = vmul.f32 %v182, %v182
      %v592 = vmul.f32 %v183, %v183
      %v593 = vmul.f32 %v184, %v184
      %v594 = vmul.f32 %v185, %v185
      %v595 = vmul.f32 %v186, %v186
      %v596 = vmul.f32 %v187, %v187
      %v597 = vmul.f32 %v188, %v188
      %v598 = vmul.f32 %v189, %v189
      %v599 = vmul.f32 %v190, %v190
      %v600 = vmul.f32 %v191, %v191
      %v601 = vmul.f32 %v192, %v192
      %v602 = vmul.f32 %v193, %v193
      %v603 = vmul.f32 %v194, %v194
      %v604 = vmul.f32 %v195, %v195
      %v605 = vmul.f32 %v196, %v196
      %v606 = vmul.f32 %v197, %v197
      %v607 = vmul.f32 %v198, %v198
      %v608 = vmul.f32 %v199, %v199
      %v609 = vmul.f32 %v200, %v200
      %v610 = vmul.f32 %v201, %v201
      %v611 = vmul.f32 %v202, %v202
      %v612 = vmul.f32 %v203, %v203
      %v613 = vmul.f32 %v204, %v204
      %v614 = vmul.f32 %v205, %v205
      %v615 = vmul.f32 %v206, %v206
      %v616 = vmul.f32 %v207, %v207
      %v617 = vmul.f32 %v208, %v208
      %v618 = vmul.f32 %v209, %v209
      %v619 = vmul.f32 %v210, %v210
      %v620 = vmul.f32 %v211, %v211
      %v621 = vmul.f32 %v212, %v212
      %v622 = vmul.f32 %v213, %v213
      %v623 = vmul.f32 %v214, %v214
      %v624 = vmul.f32 %v215, %v215
      %v625 = vmul.f32 %v216, %v216
      %v626 = vmul.f32 %v217, %v217
      %v627 = vmul.f32 %v218, %v218
      %v628 = vmul.f32 %v219, %v219
      %v629 = vmul.f32 %v220, %v220
      %v630 = vmul.f32 %v221, %v221
      %v631 = vmul.f32 %v222, %v222
      %v632 = vmul.f32 %v223, %v223
      %v633 = vmul.f32 %v224, %v224
      %v634 = vmul.f32 %v225, %v225
      %v635 = vmul.f32 %v226, %v226
      %v636 = vmul.f32 %v227, %v227
      %v637 = vmul.f32 %v228, %v228
      %v638 = vmul.f32 %v229, %v229
      %v639 = vmul.f32 %v230, %v230
      %v640 = vmul.f32 %v231, %v231
      %v641 = vmul.f32 %v232, %v232
      %v642 = vmul.f32 %v233, %v233
      %v643 = vmul.f32 %v234, %v234
      %v644 = vmul.f32 %v235, %v235
      %v645 = vmul.f32 %v236, %v236
      %v646 = vmul.f32 %v237, %v237
      %v647 = vmul.f32 %v238, %v238
      %v648 = vmul.f32 %v239, %v239
      %v649 = vmul.f32 %v240, %v240
      %v650 = vmul.f32 %v241, %v241
      %v651 = vmul.f32 %v242, %v242
      %v652 = vmul.f32 %v243, %v243
      %v653 = vmul.f32 %v244, %v244
      %v654 = vmul.f32 %v245, %v245
      %v655 = vmul.f32 %v246, %v246
      %v656 = vmul.f32 %v247, %v247
      %v657 = vmul.f32 %v248, %v248
      %v658 = vmul.f32 %v249, %v249
      %v659 = vmul.f32 %v250, %v250
      %v660 = vmul.f32 %v251, %v251
      %v661 = vmul.f32 %v252, %v252
      %v662 = vmul.f32 %v253, %v253
      %v663 = vmul.f32 %v254, %v254
      %v664 = vmul.f32 %v255, %v255
      %v665 = vmul.f32 %v256, %v256
      %v666 = vmul.f32 %v257, %v257
      %v667 = vmul.f32 %v258, %v258
      %v668 = vmul.f32 %v259, %v259
      %v669 = vmul.f32 %v260, %v260
      %v670 = vmul.f32 %v261, %v261
      %v671 = vmul.f32 %v262, %v262
      %v672 = vmul.f32 %v263, %v263
      %v673 = vmul.f32 %v264, %v264
      %v674 = vmul.f32 %v265, %v265
      %v675 = vmul.f32 %v266, %v266
      %v676 = vmul.f32 %v267, %v267
      %v677 = vmul.f32 %v268, %v268
      %v678 = vmul.f32 %v269, %v269
      %v679 = vmul.f32 %v270, %v270
      %v680 = vmul.f32 %v271, %v271
      %v681 = vmul.f32 %v272, %v272
      %v682 = vmul.f32 %v273, %v273
      %v683 = vmul.f32 %v274, %v274
      %v684 = vmul.f32 %v275, %v275
      %v685 = vmul.f32 %v276, %v276
      %v686 = vmul.f32 %v277, %v277
      %v687 = vmul.f32 %v278, %v278
      %v688 = vmul.f32 %v279, %v279
      %v689 = vmul.f32 %v280, %v280
      %v690 = vmul.f32 %v281, %v281
      %v691 = vmul.f32 %v282, %v282
      %v692 = vmul.f32 %v283, %v283
      %v693 = vmul.f32 %v284, %v284
      %v694 = vmul.f32 %v285, %v285
      %v695 = vmul.f32 %v286, %v286
      %v696 = vmul.f32 %v287, %v287
      %v697 = vmul.f32 %v288, %v288
      %v698 = vmul.f32 %v289, %v289
      %v699 = vmul.f32 %v290, %v290
      %v700 = vmul.f32 %v291, %v291
      %v701 = vmul.f32 %v292, %v292
      %v702 = vmul.f32 %v293, %v293
      %v703 = vmul.f32 %v294, %v294
      %v704 = vmul.f32 %v295, %v295
      %v705 = vmul.f32 %v296, %v296
      %v706 = vmul.f32 %v297, %v297
      %v707 = vmul.f32 %v298, %v298
      %v708 = vmul.f32 %v299, %v299
      %v709 = vmul.f32 %v300, %v300
      %v710 = vmul.f32 %v301, %v301
      %v711 = vmul.f32 %v302, %v302
      %v712 = vmul.f32 %v303, %v303
      %v713 = vmul.f32 %v304, %v304
      %v714 = vmul.f32 %v305, %v305
      %v715 = vmul.f32 %v306, %v306
      %v716 = vmul.f32 %v307, %v307
      %v717 = vmul.f32 %v308, %v308
      %v718 = vmul.f32 %v309, %v309
      %v719 = vsel %vm310, %v584, 0.0
      %v720 = vadd.f32 %v583, %v719
      %721 = vadd.xlane.f32.xlu0 %v720
      %v722 = vpop.xlane.xlu0 %721
      %v723 = vsel %vm310, %v586, 0.0
      %v724 = vadd.f32 %v585, %v723
      %725 = vadd.xlane.f32.xlu0 %v724
      %v726 = vpop.xlane.xlu0 %725
      %v727 = vsel %vm310, %v588, 0.0
      %v728 = vadd.f32 %v587, %v727
      %729 = vadd.xlane.f32.xlu0 %v728
      %v730 = vpop.xlane.xlu0 %729
      %v731 = vsel %vm310, %v590, 0.0
      %v732 = vadd.f32 %v589, %v731
      %733 = vadd.xlane.f32.xlu0 %v732
      %v734 = vpop.xlane.xlu0 %733
      %v735 = vsel %vm310, %v592, 0.0
      %v736 = vadd.f32 %v591, %v735
      %737 = vadd.xlane.f32.xlu0 %v736
      %v738 = vpop.xlane.xlu0 %737
      %v739 = vsel %vm310, %v594, 0.0
      %v740 = vadd.f32 %v593, %v739
      %741 = vadd.xlane.f32.xlu0 %v740
      %v742 = vpop.xlane.xlu0 %741
      %v743 = vsel %vm310, %v596, 0.0
      %v744 = vadd.f32 %v595, %v743
      %745 = vadd.xlane.f32.xlu0 %v744
      %v746 = vpop.xlane.xlu0 %745
      %v747 = vsel %vm310, %v598, 0.0
      %v748 = vadd.f32 %v597, %v747
      %749 = vadd.xlane.f32.xlu0 %v748
      %v750 = vpop.xlane.xlu0 %749
      %v751 = vsel %vm310, %v600, 0.0
      %v752 = vadd.f32 %v599, %v751
      %753 = vadd.xlane.f32.xlu0 %v752
      %v754 = vpop.xlane.xlu0 %753
      %v755 = vsel %vm310, %v602, 0.0
      %v756 = vadd.f32 %v601, %v755
      %757 = vadd.xlane.f32.xlu0 %v756
      %v758 = vpop.xlane.xlu0 %757
      %v759 = vsel %vm310, %v604, 0.0
      %v760 = vadd.f32 %v603, %v759
      %761 = vadd.xlane.f32.xlu0 %v760
      %v762 = vpop.xlane.xlu0 %761
      %v763 = vsel %vm310, %v606, 0.0
      %v764 = vadd.f32 %v605, %v763
      %765 = vadd.xlane.f32.xlu0 %v764
      %v766 = vpop.xlane.xlu0 %765
      %v767 = vsel %vm310, %v608, 0.0
      %v768 = vadd.f32 %v607, %v767
      %769 = vadd.xlane.f32.xlu0 %v768
      %v770 = vpop.xlane.xlu0 %769
      %v771 = vsel %vm310, %v610, 0.0
      %v772 = vadd.f32 %v609, %v771
      %773 = vadd.xlane.f32.xlu0 %v772
      %v774 = vpop.xlane.xlu0 %773
      %v775 = vsel %vm310, %v612, 0.0
      %v776 = vadd.f32 %v611, %v775
      %777 = vadd.xlane.f32.xlu0 %v776
      %v778 = vpop.xlane.xlu0 %777
      %v779 = vsel %vm310, %v614, 0.0
      %v780 = vadd.f32 %v613, %v779
      %781 = vadd.xlane.f32.xlu0 %v780
      %v782 = vpop.xlane.xlu0 %781
      %v783 = vsel %vm310, %v616, 0.0
      %v784 = vadd.f32 %v615, %v783
      %785 = vadd.xlane.f32.xlu0 %v784
      %v786 = vpop.xlane.xlu0 %785
      %v787 = vsel %vm310, %v618, 0.0
      %v788 = vadd.f32 %v617, %v787
      %789 = vadd.xlane.f32.xlu0 %v788
      %v790 = vpop.xlane.xlu0 %789
      %v791 = vsel %vm310, %v620, 0.0
      %v792 = vadd.f32 %v619, %v791
      %793 = vadd.xlane.f32.xlu0 %v792
      %v794 = vpop.xlane.xlu0 %793
      %v795 = vsel %vm310, %v622, 0.0
      %v796 = vadd.f32 %v621, %v795
      %797 = vadd.xlane.f32.xlu0 %v796
      %v798 = vpop.xlane.xlu0 %797
      %v799 = vsel %vm310, %v624, 0.0
      %v800 = vadd.f32 %v623, %v799
      %801 = vadd.xlane.f32.xlu0 %v800
      %v802 = vpop.xlane.xlu0 %801
      %v803 = vsel %vm310, %v626, 0.0
      %v804 = vadd.f32 %v625, %v803
      %805 = vadd.xlane.f32.xlu0 %v804
      %v806 = vpop.xlane.xlu0 %805
      %v807 = vsel %vm310, %v628, 0.0
      %v808 = vadd.f32 %v627, %v807
      %809 = vadd.xlane.f32.xlu0 %v808
      %v810 = vpop.xlane.xlu0 %809
      %v811 = vsel %vm310, %v630, 0.0
      %v812 = vadd.f32 %v629, %v811
      %813 = vadd.xlane.f32.xlu0 %v812
      %v814 = vpop.xlane.xlu0 %813
      %v815 = vsel %vm310, %v632, 0.0
      %v816 = vadd.f32 %v631, %v815
      %817 = vadd.xlane.f32.xlu0 %v816
      %v818 = vpop.xlane.xlu0 %817
      %v819 = vsel %vm310, %v634, 0.0
      %v820 = vadd.f32 %v633, %v819
      %821 = vadd.xlane.f32.xlu0 %v820
      %v822 = vpop.xlane.xlu0 %821
      %v823 = vsel %vm310, %v636, 0.0
      %v824 = vadd.f32 %v635, %v823
      %825 = vadd.xlane.f32.xlu0 %v824
      %v826 = vpop.xlane.xlu0 %825
      %v827 = vsel %vm310, %v638, 0.0
      %v828 = vadd.f32 %v637, %v827
      %829 = vadd.xlane.f32.xlu0 %v828
      %v830 = vpop.xlane.xlu0 %829
      %v831 = vsel %vm310, %v640, 0.0
      %v832 = vadd.f32 %v639, %v831
      %833 = vadd.xlane.f32.xlu0 %v832
      %v834 = vpop.xlane.xlu0 %833
      %v835 = vsel %vm310, %v642, 0.0
      %v836 = vadd.f32 %v641, %v835
      %837 = vadd.xlane.f32.xlu0 %v836
      %v838 = vpop.xlane.xlu0 %837
      %v839 = vsel %vm310, %v644, 0.0
      %v840 = vadd.f32 %v643, %v839
      %841 = vadd.xlane.f32.xlu0 %v840
      %v842 = vpop.xlane.xlu0 %841
      %v843 = vsel %vm310, %v646, 0.0
      %v844 = vadd.f32 %v645, %v843
      %845 = vadd.xlane.f32.xlu0 %v844
      %v846 = vpop.xlane.xlu0 %845
      %v847 = vsel %vm310, %v648, 0.0
      %v848 = vadd.f32 %v647, %v847
      %849 = vadd.xlane.f32.xlu0 %v848
      %v850 = vpop.xlane.xlu0 %849
      %v851 = vsel %vm310, %v650, 0.0
      %v852 = vadd.f32 %v649, %v851
      %853 = vadd.xlane.f32.xlu0 %v852
      %v854 = vpop.xlane.xlu0 %853
      %v855 = vsel %vm310, %v652, 0.0
      %v856 = vadd.f32 %v651, %v855
      %857 = vadd.xlane.f32.xlu0 %v856
      %v858 = vpop.xlane.xlu0 %857
      %v859 = vsel %vm310, %v654, 0.0
      %v860 = vadd.f32 %v653, %v859
      %861 = vadd.xlane.f32.xlu0 %v860
      %v862 = vpop.xlane.xlu0 %861
      %v863 = vsel %vm310, %v656, 0.0
      %v864 = vadd.f32 %v655, %v863
      %865 = vadd.xlane.f32.xlu0 %v864
      %v866 = vpop.xlane.xlu0 %865
      %v867 = vsel %vm310, %v658, 0.0
      %v868 = vadd.f32 %v657, %v867
      %869 = vadd.xlane.f32.xlu0 %v868
      %v870 = vpop.xlane.xlu0 %869
      %v871 = vsel %vm310, %v660, 0.0
      %v872 = vadd.f32 %v659, %v871
      %873 = vadd.xlane.f32.xlu0 %v872
      %v874 = vpop.xlane.xlu0 %873
      %v875 = vsel %vm310, %v662, 0.0
      %v876 = vadd.f32 %v661, %v875
      %877 = vadd.xlane.f32.xlu0 %v876
      %v878 = vpop.xlane.xlu0 %877
      %v879 = vsel %vm310, %v664, 0.0
      %v880 = vadd.f32 %v663, %v879
      %881 = vadd.xlane.f32.xlu0 %v880
      %v882 = vpop.xlane.xlu0 %881
      %v883 = vsel %vm310, %v666, 0.0
      %v884 = vadd.f32 %v665, %v883
      %885 = vadd.xlane.f32.xlu0 %v884
      %v886 = vpop.xlane.xlu0 %885
      %v887 = vsel %vm310, %v668, 0.0
      %v888 = vadd.f32 %v667, %v887
      %889 = vadd.xlane.f32.xlu0 %v888
      %v890 = vpop.xlane.xlu0 %889
      %v891 = vsel %vm310, %v670, 0.0
      %v892 = vadd.f32 %v669, %v891
      %893 = vadd.xlane.f32.xlu0 %v892
      %v894 = vpop.xlane.xlu0 %893
      %v895 = vsel %vm310, %v672, 0.0
      %v896 = vadd.f32 %v671, %v895
      %897 = vadd.xlane.f32.xlu0 %v896
      %v898 = vpop.xlane.xlu0 %897
      %v899 = vsel %vm310, %v674, 0.0
      %v900 = vadd.f32 %v673, %v899
      %901 = vadd.xlane.f32.xlu0 %v900
      %v902 = vpop.xlane.xlu0 %901
      %v903 = vsel %vm310, %v676, 0.0
      %v904 = vadd.f32 %v675, %v903
      %905 = vadd.xlane.f32.xlu0 %v904
      %v906 = vpop.xlane.xlu0 %905
      %v907 = vsel %vm310, %v678, 0.0
      %v908 = vadd.f32 %v677, %v907
      %909 = vadd.xlane.f32.xlu0 %v908
      %v910 = vpop.xlane.xlu0 %909
      %v911 = vsel %vm310, %v680, 0.0
      %v912 = vadd.f32 %v679, %v911
      %913 = vadd.xlane.f32.xlu0 %v912
      %v914 = vpop.xlane.xlu0 %913
      %v915 = vsel %vm310, %v682, 0.0
      %v916 = vadd.f32 %v681, %v915
      %917 = vadd.xlane.f32.xlu0 %v916
      %v918 = vpop.xlane.xlu0 %917
      %v919 = vsel %vm310, %v684, 0.0
      %v920 = vadd.f32 %v683, %v919
      %921 = vadd.xlane.f32.xlu0 %v920
      %v922 = vpop.xlane.xlu0 %921
      %v923 = vsel %vm310, %v686, 0.0
      %v924 = vadd.f32 %v685, %v923
      %925 = vadd.xlane.f32.xlu0 %v924
      %v926 = vpop.xlane.xlu0 %925
      %v927 = vsel %vm310, %v688, 0.0
      %v928 = vadd.f32 %v687, %v927
      %929 = vadd.xlane.f32.xlu0 %v928
      %v930 = vpop.xlane.xlu0 %929
      %v931 = vsel %vm310, %v690, 0.0
      %v932 = vadd.f32 %v689, %v931
      %933 = vadd.xlane.f32.xlu0 %v932
      %v934 = vpop.xlane.xlu0 %933
      %v935 = vsel %vm310, %v692, 0.0
      %v936 = vadd.f32 %v691, %v935
      %937 = vadd.xlane.f32.xlu0 %v936
      %v938 = vpop.xlane.xlu0 %937
      %v939 = vsel %vm310, %v694, 0.0
      %v940 = vadd.f32 %v693, %v939
      %941 = vadd.xlane.f32.xlu0 %v940
      %v942 = vpop.xlane.xlu0 %941
      %v943 = vsel %vm310, %v696, 0.0
      %v944 = vadd.f32 %v695, %v943
      %945 = vadd.xlane.f32.xlu0 %v944
      %v946 = vpop.xlane.xlu0 %945
      %v947 = vsel %vm310, %v698, 0.0
      %v948 = vadd.f32 %v697, %v947
      %949 = vadd.xlane.f32.xlu0 %v948
      %v950 = vpop.xlane.xlu0 %949
      %v951 = vsel %vm310, %v700, 0.0
      %v952 = vadd.f32 %v699, %v951
      %953 = vadd.xlane.f32.xlu0 %v952
      %v954 = vpop.xlane.xlu0 %953
      %v955 = vsel %vm310, %v702, 0.0
      %v956 = vadd.f32 %v701, %v955
      %957 = vadd.xlane.f32.xlu0 %v956
      %v958 = vpop.xlane.xlu0 %957
      %v959 = vsel %vm310, %v704, 0.0
      %v960 = vadd.f32 %v703, %v959
      %961 = vadd.xlane.f32.xlu0 %v960
      %v962 = vpop.xlane.xlu0 %961
      %v963 = vsel %vm310, %v706, 0.0
      %v964 = vadd.f32 %v705, %v963
      %965 = vadd.xlane.f32.xlu0 %v964
      %v966 = vpop.xlane.xlu0 %965
      %v967 = vsel %vm310, %v708, 0.0
      %v968 = vadd.f32 %v707, %v967
      %969 = vadd.xlane.f32.xlu0 %v968
      %v970 = vpop.xlane.xlu0 %969
      %v971 = vsel %vm310, %v710, 0.0
      %v972 = vadd.f32 %v709, %v971
      %973 = vadd.xlane.f32.xlu0 %v972
      %v974 = vpop.xlane.xlu0 %973
      %v975 = vsel %vm310, %v712, 0.0
      %v976 = vadd.f32 %v711, %v975
      %977 = vadd.xlane.f32.xlu0 %v976
      %v978 = vpop.xlane.xlu0 %977
      %v979 = vsel %vm310, %v714, 0.0
      %v980 = vadd.f32 %v713, %v979
      %981 = vadd.xlane.f32.xlu0 %v980
      %v982 = vpop.xlane.xlu0 %981
      %v983 = vsel %vm310, %v716, 0.0
      %v984 = vadd.f32 %v715, %v983
      %985 = vadd.xlane.f32.xlu0 %v984
      %v986 = vpop.xlane.xlu0 %985
      %v987 = vsel %vm310, %v718, 0.0
      %v988 = vadd.f32 %v717, %v987
      %989 = vadd.xlane.f32.xlu0 %v988
      %v990 = vpop.xlane.xlu0 %989
      %v991 = vmul.f32 %v314, 0.0051020407
      %v992 = vmul.f32 %v318, 0.0051020407
      %v993 = vmul.f32 %v322, 0.0051020407
      %v994 = vmul.f32 %v326, 0.0051020407
      %v995 = vmul.f32 %v330, 0.0051020407
      %v996 = vmul.f32 %v334, 0.0051020407
      %v997 = vmul.f32 %v338, 0.0051020407
      %v998 = vmul.f32 %v342, 0.0051020407
      %v999 = vmul.f32 %v346, 0.0051020407
      %v1000 = vmul.f32 %v350, 0.0051020407
      %v1001 = vmul.f32 %v354, 0.0051020407
      %v1002 = vmul.f32 %v358, 0.0051020407
      %v1003 = vmul.f32 %v362, 0.0051020407
      %v1004 = vmul.f32 %v366, 0.0051020407
      %v1005 = vmul.f32 %v370, 0.0051020407
      %v1006 = vmul.f32 %v374, 0.0051020407
      %v1007 = vmul.f32 %v378, 0.0051020407
      %v1008 = vmul.f32 %v382, 0.0051020407
      %v1009 = vmul.f32 %v386, 0.0051020407
      %v1010 = vmul.f32 %v390, 0.0051020407
      %v1011 = vmul.f32 %v394, 0.0051020407
      %v1012 = vmul.f32 %v398, 0.0051020407
      %v1013 = vmul.f32 %v402, 0.0051020407
      %v1014 = vmul.f32 %v406, 0.0051020407
      %v1015 = vmul.f32 %v410, 0.0051020407
      %v1016 = vmul.f32 %v414, 0.0051020407
      %v1017 = vmul.f32 %v418, 0.0051020407
      %v1018 = vmul.f32 %v422, 0.0051020407
      %v1019 = vmul.f32 %v426, 0.0051020407
      %v1020 = vmul.f32 %v430, 0.0051020407
      %v1021 = vmul.f32 %v434, 0.0051020407
      %v1022 = vmul.f32 %v438, 0.0051020407
      %v1023 = vmul.f32 %v442, 0.0051020407
      %v1024 = vmul.f32 %v446, 0.0051020407
      %v1025 = vmul.f32 %v450, 0.0051020407
      %v1026 = vmul.f32 %v454, 0.0051020407
      %v1027 = vmul.f32 %v458, 0.0051020407
      %v1028 = vmul.f32 %v462, 0.0051020407
      %v1029 = vmul.f32 %v466, 0.0051020407
      %v1030 = vmul.f32 %v470, 0.0051020407
      %v1031 = vmul.f32 %v474, 0.0051020407
      %v1032 = vmul.f32 %v478, 0.0051020407
      %v1033 = vmul.f32 %v482, 0.0051020407
      %v1034 = vmul.f32 %v486, 0.0051020407
      %v1035 = vmul.f32 %v490, 0.0051020407
      %v1036 = vmul.f32 %v494, 0.0051020407
      %v1037 = vmul.f32 %v498, 0.0051020407
      %v1038 = vmul.f32 %v502, 0.0051020407
      %v1039 = vmul.f32 %v506, 0.0051020407
      %v1040 = vmul.f32 %v510, 0.0051020407
      %v1041 = vmul.f32 %v514, 0.0051020407
      %v1042 = vmul.f32 %v518, 0.0051020407
      %v1043 = vmul.f32 %v522, 0.0051020407
      %v1044 = vmul.f32 %v526, 0.0051020407
      %v1045 = vmul.f32 %v530, 0.0051020407
      %v1046 = vmul.f32 %v534, 0.0051020407
      %v1047 = vmul.f32 %v538, 0.0051020407
      %v1048 = vmul.f32 %v542, 0.0051020407
      %v1049 = vmul.f32 %v546, 0.0051020407
      %v1050 = vmul.f32 %v550, 0.0051020407
      %v1051 = vmul.f32 %v554, 0.0051020407
      %v1052 = vmul.f32 %v558, 0.0051020407
      %v1053 = vmul.f32 %v562, 0.0051020407
      %v1054 = vmul.f32 %v566, 0.0051020407
      %v1055 = vmul.f32 %v570, 0.0051020407
      %v1056 = vmul.f32 %v574, 0.0051020407
      %v1057 = vmul.f32 %v578, 0.0051020407
      %v1058 = vmul.f32 %v582, 0.0051020407
      %v1059 = vmul.f32 %v722, 0.0051020407
      %v1060 = vmul.f32 %v726, 0.0051020407
      %v1061 = vmul.f32 %v730, 0.0051020407
      %v1062 = vmul.f32 %v734, 0.0051020407
      %v1063 = vmul.f32 %v738, 0.0051020407
      %v1064 = vmul.f32 %v742, 0.0051020407
      %v1065 = vmul.f32 %v746, 0.0051020407
      %v1066 = vmul.f32 %v750, 0.0051020407
      %v1067 = vmul.f32 %v754, 0.0051020407
      %v1068 = vmul.f32 %v758, 0.0051020407
      %v1069 = vmul.f32 %v762, 0.0051020407
      %v1070 = vmul.f32 %v766, 0.0051020407
      %v1071 = vmul.f32 %v770, 0.0051020407
      %v1072 = vmul.f32 %v774, 0.0051020407
      %v1073 = vmul.f32 %v778, 0.0051020407
      %v1074 = vmul.f32 %v782, 0.0051020407
      %v1075 = vmul.f32 %v786, 0.0051020407
      %v1076 = vmul.f32 %v790, 0.0051020407
      %v1077 = vmul.f32 %v794, 0.0051020407
      %v1078 = vmul.f32 %v798, 0.0051020407
      %v1079 = vmul.f32 %v802, 0.0051020407
      %v1080 = vmul.f32 %v806, 0.0051020407
      %v1081 = vmul.f32 %v810, 0.0051020407
      %v1082 = vmul.f32 %v814, 0.0051020407
      %v1083 = vmul.f32 %v818, 0.0051020407
      %v1084 = vmul.f32 %v822, 0.0051020407
      %v1085 = vmul.f32 %v826, 0.0051020407
      %v1086 = vmul.f32 %v830, 0.0051020407
      %v1087 = vmul.f32 %v834, 0.0051020407
      %v1088 = vmul.f32 %v838, 0.0051020407
      %v1089 = vmul.f32 %v842, 0.0051020407
      %v1090 = vmul.f32 %v846, 0.0051020407
      %v1091 = vmul.f32 %v850, 0.0051020407
      %v1092 = vmul.f32 %v854, 0.0051020407
      %v1093 = vmul.f32 %v858, 0.0051020407
      %v1094 = vmul.f32 %v862, 0.0051020407
      %v1095 = vmul.f32 %v866, 0.0051020407
      %v1096 = vmul.f32 %v870, 0.0051020407
      %v1097 = vmul.f32 %v874, 0.0051020407
      %v1098 = vmul.f32 %v878, 0.0051020407
      %v1099 = vmul.f32 %v882, 0.0051020407
      %v1100 = vmul.f32 %v886, 0.0051020407
      %v1101 = vmul.f32 %v890, 0.0051020407
      %v1102 = vmul.f32 %v894, 0.0051020407
      %v1103 = vmul.f32 %v898, 0.0051020407
      %v1104 = vmul.f32 %v902, 0.0051020407
      %v1105 = vmul.f32 %v906, 0.0051020407
      %v1106 = vmul.f32 %v910, 0.0051020407
      %v1107 = vmul.f32 %v914, 0.0051020407
      %v1108 = vmul.f32 %v918, 0.0051020407
      %v1109 = vmul.f32 %v922, 0.0051020407
      %v1110 = vmul.f32 %v926, 0.0051020407
      %v1111 = vmul.f32 %v930, 0.0051020407
      %v1112 = vmul.f32 %v934, 0.0051020407
      %v1113 = vmul.f32 %v938, 0.0051020407
      %v1114 = vmul.f32 %v942, 0.0051020407
      %v1115 = vmul.f32 %v946, 0.0051020407
      %v1116 = vmul.f32 %v950, 0.0051020407
      %v1117 = vmul.f32 %v954, 0.0051020407
      %v1118 = vmul.f32 %v958, 0.0051020407
      %v1119 = vmul.f32 %v962, 0.0051020407
      %v1120 = vmul.f32 %v966, 0.0051020407
      %v1121 = vmul.f32 %v970, 0.0051020407
      %v1122 = vmul.f32 %v974, 0.0051020407
      %v1123 = vmul.f32 %v978, 0.0051020407
      %v1124 = vmul.f32 %v982, 0.0051020407
      %v1125 = vmul.f32 %v986, 0.0051020407
      %v1126 = vmul.f32 %v990, 0.0051020407
      %v1127 = vmul.f32 %v991, %v991
      %v1128 = vmul.f32 %v992, %v992
      %v1129 = vmul.f32 %v993, %v993
      %v1130 = vmul.f32 %v994, %v994
      %v1131 = vmul.f32 %v995, %v995
      %v1132 = vmul.f32 %v996, %v996
      %v1133 = vmul.f32 %v997, %v997
      %v1134 = vmul.f32 %v998, %v998
      %v1135 = vmul.f32 %v999, %v999
      %v1136 = vmul.f32 %v1000, %v1000
      %v1137 = vmul.f32 %v1001, %v1001
      %v1138 = vmul.f32 %v1002, %v1002
      %v1139 = vmul.f32 %v1003, %v1003
      %v1140 = vmul.f32 %v1004, %v1004
      %v1141 = vmul.f32 %v1005, %v1005
      %v1142 = vmul.f32 %v1006, %v1006
      %v1143 = vmul.f32 %v1007, %v1007
      %v1144 = vmul.f32 %v1008, %v1008
      %v1145 = vmul.f32 %v1009, %v1009
      %v1146 = vmul.f32 %v1010, %v1010
      %v1147 = vmul.f32 %v1011, %v1011
      %v1148 = vmul.f32 %v1012, %v1012
      %v1149 = vmul.f32 %v1013, %v1013
      %v1150 = vmul.f32 %v1014, %v1014
      %v1151 = vmul.f32 %v1015, %v1015
      %v1152 = vmul.f32 %v1016, %v1016
      %v1153 = vmul.f32 %v1017, %v1017
      %v1154 = vmul.f32 %v1018, %v1018
      %v1155 = vmul.f32 %v1019, %v1019
      %v1156 = vmul.f32 %v1020, %v1020
      %v1157 = vmul.f32 %v1021, %v1021
      %v1158 = vmul.f32 %v1022, %v1022
      %v1159 = vmul.f32 %v1023, %v1023
      %v1160 = vmul.f32 %v1024, %v1024
      %v1161 = vmul.f32 %v1025, %v1025
      %v1162 = vmul.f32 %v1026, %v1026
      %v1163 = vmul.f32 %v1027, %v1027
      %v1164 = vmul.f32 %v1028, %v1028
      %v1165 = vmul.f32 %v1029, %v1029
      %v1166 = vmul.f32 %v1030, %v1030
      %v1167 = vmul.f32 %v1031, %v1031
      %v1168 = vmul.f32 %v1032, %v1032
      %v1169 = vmul.f32 %v1033, %v1033
      %v1170 = vmul.f32 %v1034, %v1034
      %v1171 = vmul.f32 %v1035, %v1035
      %v1172 = vmul.f32 %v1036, %v1036
      %v1173 = vmul.f32 %v1037, %v1037
      %v1174 = vmul.f32 %v1038, %v1038
      %v1175 = vmul.f32 %v1039, %v1039
      %v1176 = vmul.f32 %v1040, %v1040
      %v1177 = vmul.f32 %v1041, %v1041
      %v1178 = vmul.f32 %v1042, %v1042
      %v1179 = vmul.f32 %v1043, %v1043
      %v1180 = vmul.f32 %v1044, %v1044
      %v1181 = vmul.f32 %v1045, %v1045
      %v1182 = vmul.f32 %v1046, %v1046
      %v1183 = vmul.f32 %v1047, %v1047
      %v1184 = vmul.f32 %v1048, %v1048
      %v1185 = vmul.f32 %v1049, %v1049
      %v1186 = vmul.f32 %v1050, %v1050
      %v1187 = vmul.f32 %v1051, %v1051
      %v1188 = vmul.f32 %v1052, %v1052
      %v1189 = vmul.f32 %v1053, %v1053
      %v1190 = vmul.f32 %v1054, %v1054
      %v1191 = vmul.f32 %v1055, %v1055
      %v1192 = vmul.f32 %v1056, %v1056
      %v1193 = vmul.f32 %v1057, %v1057
      %v1194 = vmul.f32 %v1058, %v1058
      %v1195 = vsub.f32 %v1059, %v1127
      %v1196 = vsub.f32 %v1060, %v1128
      %v1197 = vsub.f32 %v1061, %v1129
      %v1198 = vsub.f32 %v1062, %v1130
      %v1199 = vsub.f32 %v1063, %v1131
      %v1200 = vsub.f32 %v1064, %v1132
      %v1201 = vsub.f32 %v1065, %v1133
      %v1202 = vsub.f32 %v1066, %v1134
      %v1203 = vsub.f32 %v1067, %v1135
      %v1204 = vsub.f32 %v1068, %v1136
      %v1205 = vsub.f32 %v1069, %v1137
      %v1206 = vsub.f32 %v1070, %v1138
      %v1207 = vsub.f32 %v1071, %v1139
      %v1208 = vsub.f32 %v1072, %v1140
      %v1209 = vsub.f32 %v1073, %v1141
      %v1210 = vsub.f32 %v1074, %v1142
      %v1211 = vsub.f32 %v1075, %v1143
      %v1212 = vsub.f32 %v1076, %v1144
      %v1213 = vsub.f32 %v1077, %v1145
      %v1214 = vsub.f32 %v1078, %v1146
      %v1215 = vsub.f32 %v1079, %v1147
      %v1216 = vsub.f32 %v1080, %v1148
      %v1217 = vsub.f32 %v1081, %v1149
      %v1218 = vsub.f32 %v1082, %v1150
      %v1219 = vsub.f32 %v1083, %v1151
      %v1220 = vsub.f32 %v1084, %v1152
      %v1221 = vsub.f32 %v1085, %v1153
      %v1222 = vsub.f32 %v1086, %v1154
      %v1223 = vsub.f32 %v1087, %v1155
      %v1224 = vsub.f32 %v1088, %v1156
      %v1225 = vsub.f32 %v1089, %v1157
      %v1226 = vsub.f32 %v1090, %v1158
      %v1227 = vsub.f32 %v1091, %v1159
      %v1228 = vsub.f32 %v1092, %v1160
      %v1229 = vsub.f32 %v1093, %v1161
      %v1230 = vsub.f32 %v1094, %v1162
      %v1231 = vsub.f32 %v1095, %v1163
      %v1232 = vsub.f32 %v1096, %v1164
      %v1233 = vsub.f32 %v1097, %v1165
      %v1234 = vsub.f32 %v1098, %v1166
      %v1235 = vsub.f32 %v1099, %v1167
      %v1236 = vsub.f32 %v1100, %v1168
      %v1237 = vsub.f32 %v1101, %v1169
      %v1238 = vsub.f32 %v1102, %v1170
      %v1239 = vsub.f32 %v1103, %v1171
      %v1240 = vsub.f32 %v1104, %v1172
      %v1241 = vsub.f32 %v1105, %v1173
      %v1242 = vsub.f32 %v1106, %v1174
      %v1243 = vsub.f32 %v1107, %v1175
      %v1244 = vsub.f32 %v1108, %v1176
      %v1245 = vsub.f32 %v1109, %v1177
      %v1246 = vsub.f32 %v1110, %v1178
      %v1247 = vsub.f32 %v1111, %v1179
      %v1248 = vsub.f32 %v1112, %v1180
      %v1249 = vsub.f32 %v1113, %v1181
      %v1250 = vsub.f32 %v1114, %v1182
      %v1251 = vsub.f32 %v1115, %v1183
      %v1252 = vsub.f32 %v1116, %v1184
      %v1253 = vsub.f32 %v1117, %v1185
      %v1254 = vsub.f32 %v1118, %v1186
      %v1255 = vsub.f32 %v1119, %v1187
      %v1256 = vsub.f32 %v1120, %v1188
      %v1257 = vsub.f32 %v1121, %v1189
      %v1258 = vsub.f32 %v1122, %v1190
      %v1259 = vsub.f32 %v1123, %v1191
      %v1260 = vsub.f32 %v1124, %v1192
      %v1261 = vsub.f32 %v1125, %v1193
      %v1262 = vsub.f32 %v1126, %v1194
      %v1263 = vld [vmem:[%s165] sm:$0xff]
      %v1264 = vld [vmem:[%s165 + $0x8] sm:$0xff]
      %v1265 = vld [vmem:[%s165 + $0x10] sm:$0xff]
      %v1266 = vld [vmem:[%s165 + $0x18] sm:$0xff]
      %v1267 = vld [vmem:[%s165 + $0x20] sm:$0xff]
      %v1268 = vld [vmem:[%s165 + $0x28] sm:$0xff]
      %v1269 = vld [vmem:[%s165 + $0x30] sm:$0xff]
      %v1270 = vld [vmem:[%s165 + $0x38] sm:$0xff]
      %v1271 = vld [vmem:[%s165 + $0x40] sm:$0xff]
      %v1272 = vld [vmem:[%s165 + $0x48] sm:$0xff]
      %v1273 = vld [vmem:[%s165 + $0x50] sm:$0xff]
      %v1274 = vld [vmem:[%s165 + $0x58] sm:$0xff]
      %v1275 = vld [vmem:[%s165 + $0x60] sm:$0xff]
      %v1276 = vld [vmem:[%s165 + $0x68] sm:$0xff]
      %v1277 = vld [vmem:[%s165 + $0x70] sm:$0xff]
      %v1278 = vld [vmem:[%s165 + $0x78] sm:$0xff]
      %v1279 = vld [vmem:[%s165 + $0x80] sm:$0xff]
      %v1280 = vld [vmem:[%s165 + $0x88] sm:$0xff]
      %v1281 = vld [vmem:[%s165 + $0x90] sm:$0xff]
      %v1282 = vld [vmem:[%s165 + $0x98] sm:$0xff]
      %v1283 = vld [vmem:[%s165 + $0xa0] sm:$0xff]
      %v1284 = vld [vmem:[%s165 + $0xa8] sm:$0xff]
      %v1285 = vld [vmem:[%s165 + $0xb0] sm:$0xff]
      %v1286 = vld [vmem:[%s165 + $0xb8] sm:$0xff]
      %v1287 = vld [vmem:[%s165 + $0xc0] sm:$0xff]
      %v1288 = vld [vmem:[%s165 + $0xc8] sm:$0xff]
      %v1289 = vld [vmem:[%s165 + $0xd0] sm:$0xff]
      %v1290 = vld [vmem:[%s165 + $0xd8] sm:$0xff]
      %v1291 = vld [vmem:[%s165 + $0xe0] sm:$0xff]
      %v1292 = vld [vmem:[%s165 + $0xe8] sm:$0xff]
      %v1293 = vld [vmem:[%s165 + $0xf0] sm:$0xff]
      %v1294 = vld [vmem:[%s165 + $0xf8] sm:$0xff]
      %v1295 = vld [vmem:[%s165 + $0x100] sm:$0xff]
      %v1296 = vld [vmem:[%s165 + $0x108] sm:$0xff]
      %v1297 = vld [vmem:[%s165 + $0x110] sm:$0xff]
      %v1298 = vld [vmem:[%s165 + $0x118] sm:$0xff]
      %v1299 = vld [vmem:[%s165 + $0x120] sm:$0xff]
      %v1300 = vld [vmem:[%s165 + $0x128] sm:$0xff]
      %v1301 = vld [vmem:[%s165 + $0x130] sm:$0xff]
      %v1302 = vld [vmem:[%s165 + $0x138] sm:$0xff]
      %v1303 = vld [vmem:[%s165 + $0x140] sm:$0xff]
      %v1304 = vld [vmem:[%s165 + $0x148] sm:$0xff]
      %v1305 = vld [vmem:[%s165 + $0x150] sm:$0xff]
      %v1306 = vld [vmem:[%s165 + $0x158] sm:$0xff]
      %v1307 = vld [vmem:[%s165 + $0x160] sm:$0xff]
      %v1308 = vld [vmem:[%s165 + $0x168] sm:$0xff]
      %v1309 = vld [vmem:[%s165 + $0x170] sm:$0xff]
      %v1310 = vld [vmem:[%s165 + $0x178] sm:$0xff]
      %v1311 = vld [vmem:[%s165 + $0x180] sm:$0xff]
      %v1312 = vld [vmem:[%s165 + $0x188] sm:$0xff]
      %v1313 = vld [vmem:[%s165 + $0x190] sm:$0xff]
      %v1314 = vld [vmem:[%s165 + $0x198] sm:$0xff]
      %v1315 = vld [vmem:[%s165 + $0x1a0] sm:$0xff]
      %v1316 = vld [vmem:[%s165 + $0x1a8] sm:$0xff]
      %v1317 = vld [vmem:[%s165 + $0x1b0] sm:$0xff]
      %v1318 = vld [vmem:[%s165 + $0x1b8] sm:$0xff]
      %v1319 = vld [vmem:[%s165 + $0x1c0] sm:$0xff]
      %v1320 = vld [vmem:[%s165 + $0x1c8] sm:$0xff]
      %v1321 = vld [vmem:[%s165 + $0x1d0] sm:$0xff]
      %v1322 = vld [vmem:[%s165 + $0x1d8] sm:$0xff]
      %v1323 = vld [vmem:[%s165 + $0x1e0] sm:$0xff]
      %v1324 = vld [vmem:[%s165 + $0x1e8] sm:$0xff]
      %v1325 = vld [vmem:[%s165 + $0x1f0] sm:$0xff]
      %v1326 = vld [vmem:[%s165 + $0x1f8] sm:$0xff]
      %v1327 = vld [vmem:[%s165 + $0x200] sm:$0xff]
      %v1328 = vld [vmem:[%s165 + $0x208] sm:$0xff]
      %v1329 = vld [vmem:[%s165 + $0x210] sm:$0xff]
      %v1330 = vld [vmem:[%s165 + $0x218] sm:$0xff]
      %v1331 = vadd.f32 %v1195, 1e-05
      %v1332 = vadd.f32 %v1196, 1e-05
      %v1333 = vadd.f32 %v1197, 1e-05
      %v1334 = vadd.f32 %v1198, 1e-05
      %v1335 = vadd.f32 %v1199, 1e-05
      %v1336 = vadd.f32 %v1200, 1e-05
      %v1337 = vadd.f32 %v1201, 1e-05
      %v1338 = vadd.f32 %v1202, 1e-05
      %v1339 = vadd.f32 %v1203, 1e-05
      %v1340 = vadd.f32 %v1204, 1e-05
      %v1341 = vadd.f32 %v1205, 1e-05
      %v1342 = vadd.f32 %v1206, 1e-05
      %v1343 = vadd.f32 %v1207, 1e-05
      %v1344 = vadd.f32 %v1208, 1e-05
      %v1345 = vadd.f32 %v1209, 1e-05
      %v1346 = vadd.f32 %v1210, 1e-05
      %v1347 = vadd.f32 %v1211, 1e-05
      %v1348 = vadd.f32 %v1212, 1e-05
      %v1349 = vadd.f32 %v1213, 1e-05
      %v1350 = vadd.f32 %v1214, 1e-05
      %v1351 = vadd.f32 %v1215, 1e-05
      %v1352 = vadd.f32 %v1216, 1e-05
      %v1353 = vadd.f32 %v1217, 1e-05
      %v1354 = vadd.f32 %v1218, 1e-05
      %v1355 = vadd.f32 %v1219, 1e-05
      %v1356 = vadd.f32 %v1220, 1e-05
      %v1357 = vadd.f32 %v1221, 1e-05
      %v1358 = vadd.f32 %v1222, 1e-05
      %v1359 = vadd.f32 %v1223, 1e-05
      %v1360 = vadd.f32 %v1224, 1e-05
      %v1361 = vadd.f32 %v1225, 1e-05
      %v1362 = vadd.f32 %v1226, 1e-05
      %v1363 = vadd.f32 %v1227, 1e-05
      %v1364 = vadd.f32 %v1228, 1e-05
      %v1365 = vadd.f32 %v1229, 1e-05
      %v1366 = vadd.f32 %v1230, 1e-05
      %v1367 = vadd.f32 %v1231, 1e-05
      %v1368 = vadd.f32 %v1232, 1e-05
      %v1369 = vadd.f32 %v1233, 1e-05
      %v1370 = vadd.f32 %v1234, 1e-05
      %v1371 = vadd.f32 %v1235, 1e-05
      %v1372 = vadd.f32 %v1236, 1e-05
      %v1373 = vadd.f32 %v1237, 1e-05
      %v1374 = vadd.f32 %v1238, 1e-05
      %v1375 = vadd.f32 %v1239, 1e-05
      %v1376 = vadd.f32 %v1240, 1e-05
      %v1377 = vadd.f32 %v1241, 1e-05
      %v1378 = vadd.f32 %v1242, 1e-05
      %v1379 = vadd.f32 %v1243, 1e-05
      %v1380 = vadd.f32 %v1244, 1e-05
      %v1381 = vadd.f32 %v1245, 1e-05
      %v1382 = vadd.f32 %v1246, 1e-05
      %v1383 = vadd.f32 %v1247, 1e-05
      %v1384 = vadd.f32 %v1248, 1e-05
      %v1385 = vadd.f32 %v1249, 1e-05
      %v1386 = vadd.f32 %v1250, 1e-05
      %v1387 = vadd.f32 %v1251, 1e-05
      %v1388 = vadd.f32 %v1252, 1e-05
      %v1389 = vadd.f32 %v1253, 1e-05
      %v1390 = vadd.f32 %v1254, 1e-05
      %v1391 = vadd.f32 %v1255, 1e-05
      %v1392 = vadd.f32 %v1256, 1e-05
      %v1393 = vadd.f32 %v1257, 1e-05
      %v1394 = vadd.f32 %v1258, 1e-05
      %v1395 = vadd.f32 %v1259, 1e-05
      %v1396 = vadd.f32 %v1260, 1e-05
      %v1397 = vadd.f32 %v1261, 1e-05
      %v1398 = vadd.f32 %v1262, 1e-05
      %v1399 = vrsqrt.pop %v1331
      %v1400 = vrsqrt.pop %v1332
      %v1401 = vrsqrt.pop %v1333
      %v1402 = vrsqrt.pop %v1334
      %v1403 = vrsqrt.pop %v1335
      %v1404 = vrsqrt.pop %v1336
      %v1405 = vrsqrt.pop %v1337
      %v1406 = vrsqrt.pop %v1338
      %v1407 = vrsqrt.pop %v1339
      %v1408 = vrsqrt.pop %v1340
      %v1409 = vrsqrt.pop %v1341
      %v1410 = vrsqrt.pop %v1342
      %v1411 = vrsqrt.pop %v1343
      %v1412 = vrsqrt.pop %v1344
      %v1413 = vrsqrt.pop %v1345
      %v1414 = vrsqrt.pop %v1346
      %v1415 = vrsqrt.pop %v1347
      %v1416 = vrsqrt.pop %v1348
      %v1417 = vrsqrt.pop %v1349
      %v1418 = vrsqrt.pop %v1350
      %v1419 = vrsqrt.pop %v1351
      %v1420 = vrsqrt.pop %v1352
      %v1421 = vrsqrt.pop %v1353
      %v1422 = vrsqrt.pop %v1354
      %v1423 = vrsqrt.pop %v1355
      %v1424 = vrsqrt.pop %v1356
      %v1425 = vrsqrt.pop %v1357
      %v1426 = vrsqrt.pop %v1358
      %v1427 = vrsqrt.pop %v1359
      %v1428 = vrsqrt.pop %v1360
      %v1429 = vrsqrt.pop %v1361
      %v1430 = vrsqrt.pop %v1362
      %v1431 = vrsqrt.pop %v1363
      %v1432 = vrsqrt.pop %v1364
      %v1433 = vrsqrt.pop %v1365
      %v1434 = vrsqrt.pop %v1366
      %v1435 = vrsqrt.pop %v1367
      %v1436 = vrsqrt.pop %v1368
      %v1437 = vrsqrt.pop %v1369
      %v1438 = vrsqrt.pop %v1370
      %v1439 = vrsqrt.pop %v1371
      %v1440 = vrsqrt.pop %v1372
      %v1441 = vrsqrt.pop %v1373
      %v1442 = vrsqrt.pop %v1374
      %v1443 = vrsqrt.pop %v1375
      %v1444 = vrsqrt.pop %v1376
      %v1445 = vrsqrt.pop %v1377
      %v1446 = vrsqrt.pop %v1378
      %v1447 = vrsqrt.pop %v1379
      %v1448 = vrsqrt.pop %v1380
      %v1449 = vrsqrt.pop %v1381
      %v1450 = vrsqrt.pop %v1382
      %v1451 = vrsqrt.pop %v1383
      %v1452 = vrsqrt.pop %v1384
      %v1453 = vrsqrt.pop %v1385
      %v1454 = vrsqrt.pop %v1386
      %v1455 = vrsqrt.pop %v1387
      %v1456 = vrsqrt.pop %v1388
      %v1457 = vrsqrt.pop %v1389
      %v1458 = vrsqrt.pop %v1390
      %v1459 = vrsqrt.pop %v1391
      %v1460 = vrsqrt.pop %v1392
      %v1461 = vrsqrt.pop %v1393
      %v1462 = vrsqrt.pop %v1394
      %v1463 = vrsqrt.pop %v1395
      %v1464 = vrsqrt.pop %v1396
      %v1465 = vrsqrt.pop %v1397
      %v1466 = vrsqrt.pop %v1398
      %v1467 = vmul.f32 %v1263, %v1399
      %v1468 = vmul.f32 %v1264, %v1400
      %v1469 = vmul.f32 %v1265, %v1401
      %v1470 = vmul.f32 %v1266, %v1402
      %v1471 = vmul.f32 %v1267, %v1403
      %v1472 = vmul.f32 %v1268, %v1404
      %v1473 = vmul.f32 %v1269, %v1405
      %v1474 = vmul.f32 %v1270, %v1406
      %v1475 = vmul.f32 %v1271, %v1407
      %v1476 = vmul.f32 %v1272, %v1408
      %v1477 = vmul.f32 %v1273, %v1409
      %v1478 = vmul.f32 %v1274, %v1410
      %v1479 = vmul.f32 %v1275, %v1411
      %v1480 = vmul.f32 %v1276, %v1412
      %v1481 = vmul.f32 %v1277, %v1413
      %v1482 = vmul.f32 %v1278, %v1414
      %v1483 = vmul.f32 %v1279, %v1415
      %v1484 = vmul.f32 %v1280, %v1416
      %v1485 = vmul.f32 %v1281, %v1417
      %v1486 = vmul.f32 %v1282, %v1418
      %v1487 = vmul.f32 %v1283, %v1419
      %v1488 = vmul.f32 %v1284, %v1420
      %v1489 = vmul.f32 %v1285, %v1421
      %v1490 = vmul.f32 %v1286, %v1422
      %v1491 = vmul.f32 %v1287, %v1423
      %v1492 = vmul.f32 %v1288, %v1424
      %v1493 = vmul.f32 %v1289, %v1425
      %v1494 = vmul.f32 %v1290, %v1426
      %v1495 = vmul.f32 %v1291, %v1427
      %v1496 = vmul.f32 %v1292, %v1428
      %v1497 = vmul.f32 %v1293, %v1429
      %v1498 = vmul.f32 %v1294, %v1430
      %v1499 = vmul.f32 %v1295, %v1431
      %v1500 = vmul.f32 %v1296, %v1432
      %v1501 = vmul.f32 %v1297, %v1433
      %v1502 = vmul.f32 %v1298, %v1434
      %v1503 = vmul.f32 %v1299, %v1435
      %v1504 = vmul.f32 %v1300, %v1436
      %v1505 = vmul.f32 %v1301, %v1437
      %v1506 = vmul.f32 %v1302, %v1438
      %v1507 = vmul.f32 %v1303, %v1439
      %v1508 = vmul.f32 %v1304, %v1440
      %v1509 = vmul.f32 %v1305, %v1441
      %v1510 = vmul.f32 %v1306, %v1442
      %v1511 = vmul.f32 %v1307, %v1443
      %v1512 = vmul.f32 %v1308, %v1444
      %v1513 = vmul.f32 %v1309, %v1445
      %v1514 = vmul.f32 %v1310, %v1446
      %v1515 = vmul.f32 %v1311, %v1447
      %v1516 = vmul.f32 %v1312, %v1448
      %v1517 = vmul.f32 %v1313, %v1449
      %v1518 = vmul.f32 %v1314, %v1450
      %v1519 = vmul.f32 %v1315, %v1451
      %v1520 = vmul.f32 %v1316, %v1452
      %v1521 = vmul.f32 %v1317, %v1453
      %v1522 = vmul.f32 %v1318, %v1454
      %v1523 = vmul.f32 %v1319, %v1455
      %v1524 = vmul.f32 %v1320, %v1456
      %v1525 = vmul.f32 %v1321, %v1457
      %v1526 = vmul.f32 %v1322, %v1458
      %v1527 = vmul.f32 %v1323, %v1459
      %v1528 = vmul.f32 %v1324, %v1460
      %v1529 = vmul.f32 %v1325, %v1461
      %v1530 = vmul.f32 %v1326, %v1462
      %v1531 = vmul.f32 %v1327, %v1463
      %v1532 = vmul.f32 %v1328, %v1464
      %v1533 = vmul.f32 %v1329, %v1465
      %v1534 = vmul.f32 %v1330, %v1466
      %v1535 = vmul.f32 %v991, %v1467
      %v1536 = vmul.f32 %v992, %v1468
      %v1537 = vmul.f32 %v993, %v1469
      %v1538 = vmul.f32 %v994, %v1470
      %v1539 = vmul.f32 %v995, %v1471
      %v1540 = vmul.f32 %v996, %v1472
      %v1541 = vmul.f32 %v997, %v1473
      %v1542 = vmul.f32 %v998, %v1474
      %v1543 = vmul.f32 %v999, %v1475
      %v1544 = vmul.f32 %v1000, %v1476
      %v1545 = vmul.f32 %v1001, %v1477
      %v1546 = vmul.f32 %v1002, %v1478
      %v1547 = vmul.f32 %v1003, %v1479
      %v1548 = vmul.f32 %v1004, %v1480
      %v1549 = vmul.f32 %v1005, %v1481
      %v1550 = vmul.f32 %v1006, %v1482
      %v1551 = vmul.f32 %v1007, %v1483
      %v1552 = vmul.f32 %v1008, %v1484
      %v1553 = vmul.f32 %v1009, %v1485
      %v1554 = vmul.f32 %v1010, %v1486
      %v1555 = vmul.f32 %v1011, %v1487
      %v1556 = vmul.f32 %v1012, %v1488
      %v1557 = vmul.f32 %v1013, %v1489
      %v1558 = vmul.f32 %v1014, %v1490
      %v1559 = vmul.f32 %v1015, %v1491
      %v1560 = vmul.f32 %v1016, %v1492
      %v1561 = vmul.f32 %v1017, %v1493
      %v1562 = vmul.f32 %v1018, %v1494
      %v1563 = vmul.f32 %v1019, %v1495
      %v1564 = vmul.f32 %v1020, %v1496
      %v1565 = vmul.f32 %v1021, %v1497
      %v1566 = vmul.f32 %v1022, %v1498
      %v1567 = vmul.f32 %v1023, %v1499
      %v1568 = vmul.f32 %v1024, %v1500
      %v1569 = vmul.f32 %v1025, %v1501
      %v1570 = vmul.f32 %v1026, %v1502
      %v1571 = vmul.f32 %v1027, %v1503
      %v1572 = vmul.f32 %v1028, %v1504
      %v1573 = vmul.f32 %v1029, %v1505
      %v1574 = vmul.f32 %v1030, %v1506
      %v1575 = vmul.f32 %v1031, %v1507
      %v1576 = vmul.f32 %v1032, %v1508
      %v1577 = vmul.f32 %v1033, %v1509
      %v1578 = vmul.f32 %v1034, %v1510
      %v1579 = vmul.f32 %v1035, %v1511
      %v1580 = vmul.f32 %v1036, %v1512
      %v1581 = vmul.f32 %v1037, %v1513
      %v1582 = vmul.f32 %v1038, %v1514
      %v1583 = vmul.f32 %v1039, %v1515
      %v1584 = vmul.f32 %v1040, %v1516
      %v1585 = vmul.f32 %v1041, %v1517
      %v1586 = vmul.f32 %v1042, %v1518
      %v1587 = vmul.f32 %v1043, %v1519
      %v1588 = vmul.f32 %v1044, %v1520
      %v1589 = vmul.f32 %v1045, %v1521
      %v1590 = vmul.f32 %v1046, %v1522
      %v1591 = vmul.f32 %v1047, %v1523
      %v1592 = vmul.f32 %v1048, %v1524
      %v1593 = vmul.f32 %v1049, %v1525
      %v1594 = vmul.f32 %v1050, %v1526
      %v1595 = vmul.f32 %v1051, %v1527
      %v1596 = vmul.f32 %v1052, %v1528
      %v1597 = vmul.f32 %v1053, %v1529
      %v1598 = vmul.f32 %v1054, %v1530
      %v1599 = vmul.f32 %v1055, %v1531
      %v1600 = vmul.f32 %v1056, %v1532
      %v1601 = vmul.f32 %v1057, %v1533
      %v1602 = vmul.f32 %v1058, %v1534
      %1671 = vrot.lane.b32.xlu0 %v1535, 1
      %v1672 = vpop.permute.xlu0 %1671
      %1673 = vrot.lane.b32.xlu0 %v1536, 1
      %v1674 = vpop.permute.xlu0 %1673
      %1675 = vrot.lane.b32.xlu0 %v1537, 1
      %v1676 = vpop.permute.xlu0 %1675
      %1677 = vrot.lane.b32.xlu0 %v1538, 1
      %v1678 = vpop.permute.xlu0 %1677
      %1679 = vrot.lane.b32.xlu0 %v1539, 1
      %v1680 = vpop.permute.xlu0 %1679
      %1681 = vrot.lane.b32.xlu0 %v1540, 1
      %v1682 = vpop.permute.xlu0 %1681
      %1683 = vrot.lane.b32.xlu0 %v1541, 1
      %v1684 = vpop.permute.xlu0 %1683
      %1685 = vrot.lane.b32.xlu0 %v1542, 1
      %v1686 = vpop.permute.xlu0 %1685
      %1687 = vrot.lane.b32.xlu0 %v1543, 1
      %v1688 = vpop.permute.xlu0 %1687
      %1689 = vrot.lane.b32.xlu0 %v1544, 1
      %v1690 = vpop.permute.xlu0 %1689
      %1691 = vrot.lane.b32.xlu0 %v1545, 1
      %v1692 = vpop.permute.xlu0 %1691
      %1693 = vrot.lane.b32.xlu0 %v1546, 1
      %v1694 = vpop.permute.xlu0 %1693
      %1695 = vrot.lane.b32.xlu0 %v1547, 1
      %v1696 = vpop.permute.xlu0 %1695
      %1697 = vrot.lane.b32.xlu0 %v1548, 1
      %v1698 = vpop.permute.xlu0 %1697
      %1699 = vrot.lane.b32.xlu0 %v1549, 1
      %v1700 = vpop.permute.xlu0 %1699
      %1701 = vrot.lane.b32.xlu0 %v1550, 1
      %v1702 = vpop.permute.xlu0 %1701
      %1703 = vrot.lane.b32.xlu0 %v1551, 1
      %v1704 = vpop.permute.xlu0 %1703
      %1705 = vrot.lane.b32.xlu0 %v1552, 1
      %v1706 = vpop.permute.xlu0 %1705
      %1707 = vrot.lane.b32.xlu0 %v1553, 1
      %v1708 = vpop.permute.xlu0 %1707
      %1709 = vrot.lane.b32.xlu0 %v1554, 1
      %v1710 = vpop.permute.xlu0 %1709
      %1711 = vrot.lane.b32.xlu0 %v1555, 1
      %v1712 = vpop.permute.xlu0 %1711
      %1713 = vrot.lane.b32.xlu0 %v1556, 1
      %v1714 = vpop.permute.xlu0 %1713
      %1715 = vrot.lane.b32.xlu0 %v1557, 1
      %v1716 = vpop.permute.xlu0 %1715
      %1717 = vrot.lane.b32.xlu0 %v1558, 1
      %v1718 = vpop.permute.xlu0 %1717
      %1719 = vrot.lane.b32.xlu0 %v1559, 1
      %v1720 = vpop.permute.xlu0 %1719
      %1721 = vrot.lane.b32.xlu0 %v1560, 1
      %v1722 = vpop.permute.xlu0 %1721
      %1723 = vrot.lane.b32.xlu0 %v1561, 1
      %v1724 = vpop.permute.xlu0 %1723
      %1725 = vrot.lane.b32.xlu0 %v1562, 1
      %v1726 = vpop.permute.xlu0 %1725
      %1727 = vrot.lane.b32.xlu0 %v1563, 1
      %v1728 = vpop.permute.xlu0 %1727
      %1729 = vrot.lane.b32.xlu0 %v1564, 1
      %v1730 = vpop.permute.xlu0 %1729
      %1731 = vrot.lane.b32.xlu0 %v1565, 1
      %v1732 = vpop.permute.xlu0 %1731
      %1733 = vrot.lane.b32.xlu0 %v1566, 1
      %v1734 = vpop.permute.xlu0 %1733
      %1735 = vrot.lane.b32.xlu0 %v1567, 1
      %v1736 = vpop.permute.xlu0 %1735
      %1737 = vrot.lane.b32.xlu0 %v1568, 1
      %v1738 = vpop.permute.xlu0 %1737
      %1739 = vrot.lane.b32.xlu0 %v1569, 1
      %v1740 = vpop.permute.xlu0 %1739
      %1741 = vrot.lane.b32.xlu0 %v1570, 1
      %v1742 = vpop.permute.xlu0 %1741
      %1743 = vrot.lane.b32.xlu0 %v1571, 1
      %v1744 = vpop.permute.xlu0 %1743
      %1745 = vrot.lane.b32.xlu0 %v1572, 1
      %v1746 = vpop.permute.xlu0 %1745
      %1747 = vrot.lane.b32.xlu0 %v1573, 1
      %v1748 = vpop.permute.xlu0 %1747
      %1749 = vrot.lane.b32.xlu0 %v1574, 1
      %v1750 = vpop.permute.xlu0 %1749
      %1751 = vrot.lane.b32.xlu0 %v1575, 1
      %v1752 = vpop.permute.xlu0 %1751
      %1753 = vrot.lane.b32.xlu0 %v1576, 1
      %v1754 = vpop.permute.xlu0 %1753
      %1755 = vrot.lane.b32.xlu0 %v1577, 1
      %v1756 = vpop.permute.xlu0 %1755
      %1757 = vrot.lane.b32.xlu0 %v1578, 1
      %v1758 = vpop.permute.xlu0 %1757
      %1759 = vrot.lane.b32.xlu0 %v1579, 1
      %v1760 = vpop.permute.xlu0 %1759
      %1761 = vrot.lane.b32.xlu0 %v1580, 1
      %v1762 = vpop.permute.xlu0 %1761
      %1763 = vrot.lane.b32.xlu0 %v1581, 1
      %v1764 = vpop.permute.xlu0 %1763
      %1765 = vrot.lane.b32.xlu0 %v1582, 1
      %v1766 = vpop.permute.xlu0 %1765
      %1767 = vrot.lane.b32.xlu0 %v1583, 1
      %v1768 = vpop.permute.xlu0 %1767
      %1769 = vrot.lane.b32.xlu0 %v1584, 1
      %v1770 = vpop.permute.xlu0 %1769
      %1771 = vrot.lane.b32.xlu0 %v1585, 1
      %v1772 = vpop.permute.xlu0 %1771
      %1773 = vrot.lane.b32.xlu0 %v1586, 1
      %v1774 = vpop.permute.xlu0 %1773
      %1775 = vrot.lane.b32.xlu0 %v1587, 1
      %v1776 = vpop.permute.xlu0 %1775
      %1777 = vrot.lane.b32.xlu0 %v1588, 1
      %v1778 = vpop.permute.xlu0 %1777
      %1779 = vrot.lane.b32.xlu0 %v1589, 1
      %v1780 = vpop.permute.xlu0 %1779
      %1781 = vrot.lane.b32.xlu0 %v1590, 1
      %v1782 = vpop.permute.xlu0 %1781
      %1783 = vrot.lane.b32.xlu0 %v1591, 1
      %v1784 = vpop.permute.xlu0 %1783
      %1785 = vrot.lane.b32.xlu0 %v1592, 1
      %v1786 = vpop.permute.xlu0 %1785
      %1787 = vrot.lane.b32.xlu0 %v1593, 1
      %v1788 = vpop.permute.xlu0 %1787
      %1789 = vrot.lane.b32.xlu0 %v1594, 1
      %v1790 = vpop.permute.xlu0 %1789
      %1791 = vrot.lane.b32.xlu0 %v1595, 1
      %v1792 = vpop.permute.xlu0 %1791
      %1793 = vrot.lane.b32.xlu0 %v1596, 1
      %v1794 = vpop.permute.xlu0 %1793
      %1795 = vrot.lane.b32.xlu0 %v1597, 1
      %v1796 = vpop.permute.xlu0 %1795
      %1797 = vrot.lane.b32.xlu0 %v1598, 1
      %v1798 = vpop.permute.xlu0 %1797
      %1799 = vrot.lane.b32.xlu0 %v1599, 1
      %v1800 = vpop.permute.xlu0 %1799
      %1801 = vrot.lane.b32.xlu0 %v1600, 1
      %v1802 = vpop.permute.xlu0 %1801
      %1803 = vrot.lane.b32.xlu0 %v1601, 1
      %v1804 = vpop.permute.xlu0 %1803
      %1805 = vrot.lane.b32.xlu0 %v1602, 1
      %v1806 = vpop.permute.xlu0 %1805
      %v1875 = vsub.f32 %v1263, %v1672
      %v1876 = vsub.f32 %v1264, %v1674
      %v1877 = vsub.f32 %v1265, %v1676
      %v1878 = vsub.f32 %v1266, %v1678
      %v1879 = vsub.f32 %v1267, %v1680
      %v1880 = vsub.f32 %v1268, %v1682
      %v1881 = vsub.f32 %v1269, %v1684
      %v1882 = vsub.f32 %v1270, %v1686
      %v1883 = vsub.f32 %v1271, %v1688
      %v1884 = vsub.f32 %v1272, %v1690
      %v1885 = vsub.f32 %v1273, %v1692
      %v1886 = vsub.f32 %v1274, %v1694
      %v1887 = vsub.f32 %v1275, %v1696
      %v1888 = vsub.f32 %v1276, %v1698
      %v1889 = vsub.f32 %v1277, %v1700
      %v1890 = vsub.f32 %v1278, %v1702
      %v1891 = vsub.f32 %v1279, %v1704
      %v1892 = vsub.f32 %v1280, %v1706
      %v1893 = vsub.f32 %v1281, %v1708
      %v1894 = vsub.f32 %v1282, %v1710
      %v1895 = vsub.f32 %v1283, %v1712
      %v1896 = vsub.f32 %v1284, %v1714
      %v1897 = vsub.f32 %v1285, %v1716
      %v1898 = vsub.f32 %v1286, %v1718
      %v1899 = vsub.f32 %v1287, %v1720
      %v1900 = vsub.f32 %v1288, %v1722
      %v1901 = vsub.f32 %v1289, %v1724
      %v1902 = vsub.f32 %v1290, %v1726
      %v1903 = vsub.f32 %v1291, %v1728
      %v1904 = vsub.f32 %v1292, %v1730
      %v1905 = vsub.f32 %v1293, %v1732
      %v1906 = vsub.f32 %v1294, %v1734
      %v1907 = vsub.f32 %v1295, %v1736
      %v1908 = vsub.f32 %v1296, %v1738
      %v1909 = vsub.f32 %v1297, %v1740
      %v1910 = vsub.f32 %v1298, %v1742
      %v1911 = vsub.f32 %v1299, %v1744
      %v1912 = vsub.f32 %v1300, %v1746
      %v1913 = vsub.f32 %v1301, %v1748
      %v1914 = vsub.f32 %v1302, %v1750
      %v1915 = vsub.f32 %v1303, %v1752
      %v1916 = vsub.f32 %v1304, %v1754
      %v1917 = vsub.f32 %v1305, %v1756
      %v1918 = vsub.f32 %v1306, %v1758
      %v1919 = vsub.f32 %v1307, %v1760
      %v1920 = vsub.f32 %v1308, %v1762
      %v1921 = vsub.f32 %v1309, %v1764
      %v1922 = vsub.f32 %v1310, %v1766
      %v1923 = vsub.f32 %v1311, %v1768
      %v1924 = vsub.f32 %v1312, %v1770
      %v1925 = vsub.f32 %v1313, %v1772
      %v1926 = vsub.f32 %v1314, %v1774
      %v1927 = vsub.f32 %v1315, %v1776
      %v1928 = vsub.f32 %v1316, %v1778
      %v1929 = vsub.f32 %v1317, %v1780
      %v1930 = vsub.f32 %v1318, %v1782
      %v1931 = vsub.f32 %v1319, %v1784
      %v1932 = vsub.f32 %v1320, %v1786
      %v1933 = vsub.f32 %v1321, %v1788
      %v1934 = vsub.f32 %v1322, %v1790
      %v1935 = vsub.f32 %v1323, %v1792
      %v1936 = vsub.f32 %v1324, %v1794
      %v1937 = vsub.f32 %v1325, %v1796
      %v1938 = vsub.f32 %v1326, %v1798
      %v1939 = vsub.f32 %v1327, %v1800
      %v1940 = vsub.f32 %v1328, %v1802
      %v1941 = vsub.f32 %v1329, %v1804
      %v1942 = vsub.f32 %v1330, %v1806
      %1944 = vset.pattern.permute.xlu0 0
      %1945 = vperm.xlu0 %1944, %v1467
      %v1946 = vpop.permute.xlu0 %1945
      %1949 = vset.pattern.permute.xlu0 0
      %1950 = vperm.xlu0 %1949, %v1468
      %v1951 = vpop.permute.xlu0 %1950
      %1954 = vset.pattern.permute.xlu0 0
      %1955 = vperm.xlu0 %1954, %v1469
      %v1956 = vpop.permute.xlu0 %1955
      %1959 = vset.pattern.permute.xlu0 0
      %1960 = vperm.xlu0 %1959, %v1470
      %v1961 = vpop.permute.xlu0 %1960
      %1964 = vset.pattern.permute.xlu0 0
      %1965 = vperm.xlu0 %1964, %v1471
      %v1966 = vpop.permute.xlu0 %1965
      %1969 = vset.pattern.permute.xlu0 0
      %1970 = vperm.xlu0 %1969, %v1472
      %v1971 = vpop.permute.xlu0 %1970
      %1974 = vset.pattern.permute.xlu0 0
      %1975 = vperm.xlu0 %1974, %v1473
      %v1976 = vpop.permute.xlu0 %1975
      %1979 = vset.pattern.permute.xlu0 0
      %1980 = vperm.xlu0 %1979, %v1474
      %v1981 = vpop.permute.xlu0 %1980
      %1984 = vset.pattern.permute.xlu0 0
      %1985 = vperm.xlu0 %1984, %v1475
      %v1986 = vpop.permute.xlu0 %1985
      %1989 = vset.pattern.permute.xlu0 0
      %1990 = vperm.xlu0 %1989, %v1476
      %v1991 = vpop.permute.xlu0 %1990
      %1994 = vset.pattern.permute.xlu0 0
      %1995 = vperm.xlu0 %1994, %v1477
      %v1996 = vpop.permute.xlu0 %1995
      %1999 = vset.pattern.permute.xlu0 0
      %2000 = vperm.xlu0 %1999, %v1478
      %v2001 = vpop.permute.xlu0 %2000
      %2004 = vset.pattern.permute.xlu0 0
      %2005 = vperm.xlu0 %2004, %v1479
      %v2006 = vpop.permute.xlu0 %2005
      %2009 = vset.pattern.permute.xlu0 0
      %2010 = vperm.xlu0 %2009, %v1480
      %v2011 = vpop.permute.xlu0 %2010
      %2014 = vset.pattern.permute.xlu0 0
      %2015 = vperm.xlu0 %2014, %v1481
      %v2016 = vpop.permute.xlu0 %2015
      %2019 = vset.pattern.permute.xlu0 0
      %2020 = vperm.xlu0 %2019, %v1482
      %v2021 = vpop.permute.xlu0 %2020
      %2024 = vset.pattern.permute.xlu0 0
      %2025 = vperm.xlu0 %2024, %v1483
      %v2026 = vpop.permute.xlu0 %2025
      %2029 = vset.pattern.permute.xlu0 0
      %2030 = vperm.xlu0 %2029, %v1484
      %v2031 = vpop.permute.xlu0 %2030
      %2034 = vset.pattern.permute.xlu0 0
      %2035 = vperm.xlu0 %2034, %v1485
      %v2036 = vpop.permute.xlu0 %2035
      %2039 = vset.pattern.permute.xlu0 0
      %2040 = vperm.xlu0 %2039, %v1486
      %v2041 = vpop.permute.xlu0 %2040
      %2044 = vset.pattern.permute.xlu0 0
      %2045 = vperm.xlu0 %2044, %v1487
      %v2046 = vpop.permute.xlu0 %2045
      %2049 = vset.pattern.permute.xlu0 0
      %2050 = vperm.xlu0 %2049, %v1488
      %v2051 = vpop.permute.xlu0 %2050
      %2054 = vset.pattern.permute.xlu0 0
      %2055 = vperm.xlu0 %2054, %v1489
      %v2056 = vpop.permute.xlu0 %2055
      %2059 = vset.pattern.permute.xlu0 0
      %2060 = vperm.xlu0 %2059, %v1490
      %v2061 = vpop.permute.xlu0 %2060
      %2064 = vset.pattern.permute.xlu0 0
      %2065 = vperm.xlu0 %2064, %v1491
      %v2066 = vpop.permute.xlu0 %2065
      %2069 = vset.pattern.permute.xlu0 0
      %2070 = vperm.xlu0 %2069, %v1492
      %v2071 = vpop.permute.xlu0 %2070
      %2074 = vset.pattern.permute.xlu0 0
      %2075 = vperm.xlu0 %2074, %v1493
      %v2076 = vpop.permute.xlu0 %2075
      %2079 = vset.pattern.permute.xlu0 0
      %2080 = vperm.xlu0 %2079, %v1494
      %v2081 = vpop.permute.xlu0 %2080
      %2084 = vset.pattern.permute.xlu0 0
      %2085 = vperm.xlu0 %2084, %v1495
      %v2086 = vpop.permute.xlu0 %2085
      %2089 = vset.pattern.permute.xlu0 0
      %2090 = vperm.xlu0 %2089, %v1496
      %v2091 = vpop.permute.xlu0 %2090
      %2094 = vset.pattern.permute.xlu0 0
      %2095 = vperm.xlu0 %2094, %v1497
      %v2096 = vpop.permute.xlu0 %2095
      %2099 = vset.pattern.permute.xlu0 0
      %2100 = vperm.xlu0 %2099, %v1498
      %v2101 = vpop.permute.xlu0 %2100
      %2104 = vset.pattern.permute.xlu0 0
      %2105 = vperm.xlu0 %2104, %v1499
      %v2106 = vpop.permute.xlu0 %2105
      %2109 = vset.pattern.permute.xlu0 0
      %2110 = vperm.xlu0 %2109, %v1500
      %v2111 = vpop.permute.xlu0 %2110
      %2114 = vset.pattern.permute.xlu0 0
      %2115 = vperm.xlu0 %2114, %v1501
      %v2116 = vpop.permute.xlu0 %2115
      %2119 = vset.pattern.permute.xlu0 0
      %2120 = vperm.xlu0 %2119, %v1502
      %v2121 = vpop.permute.xlu0 %2120
      %2124 = vset.pattern.permute.xlu0 0
      %2125 = vperm.xlu0 %2124, %v1503
      %v2126 = vpop.permute.xlu0 %2125
      %2129 = vset.pattern.permute.xlu0 0
      %2130 = vperm.xlu0 %2129, %v1504
      %v2131 = vpop.permute.xlu0 %2130
      %2134 = vset.pattern.permute.xlu0 0
      %2135 = vperm.xlu0 %2134, %v1505
      %v2136 = vpop.permute.xlu0 %2135
      %2139 = vset.pattern.permute.xlu0 0
      %2140 = vperm.xlu0 %2139, %v1506
      %v2141 = vpop.permute.xlu0 %2140
      %2144 = vset.pattern.permute.xlu0 0
      %2145 = vperm.xlu0 %2144, %v1507
      %v2146 = vpop.permute.xlu0 %2145
      %2149 = vset.pattern.permute.xlu0 0
      %2150 = vperm.xlu0 %2149, %v1508
      %v2151 = vpop.permute.xlu0 %2150
      %2154 = vset.pattern.permute.xlu0 0
      %2155 = vperm.xlu0 %2154, %v1509
      %v2156 = vpop.permute.xlu0 %2155
      %2159 = vset.pattern.permute.xlu0 0
      %2160 = vperm.xlu0 %2159, %v1510
      %v2161 = vpop.permute.xlu0 %2160
      %2164 = vset.pattern.permute.xlu0 0
      %2165 = vperm.xlu0 %2164, %v1511
      %v2166 = vpop.permute.xlu0 %2165
      %2169 = vset.pattern.permute.xlu0 0
      %2170 = vperm.xlu0 %2169, %v1512
      %v2171 = vpop.permute.xlu0 %2170
      %2174 = vset.pattern.permute.xlu0 0
      %2175 = vperm.xlu0 %2174, %v1513
      %v2176 = vpop.permute.xlu0 %2175
      %2179 = vset.pattern.permute.xlu0 0
      %2180 = vperm.xlu0 %2179, %v1514
      %v2181 = vpop.permute.xlu0 %2180
      %2184 = vset.pattern.permute.xlu0 0
      %2185 = vperm.xlu0 %2184, %v1515
      %v2186 = vpop.permute.xlu0 %2185
      %2189 = vset.pattern.permute.xlu0 0
      %2190 = vperm.xlu0 %2189, %v1516
      %v2191 = vpop.permute.xlu0 %2190
      %2194 = vset.pattern.permute.xlu0 0
      %2195 = vperm.xlu0 %2194, %v1517
      %v2196 = vpop.permute.xlu0 %2195
      %2199 = vset.pattern.permute.xlu0 0
      %2200 = vperm.xlu0 %2199, %v1518
      %v2201 = vpop.permute.xlu0 %2200
      %2204 = vset.pattern.permute.xlu0 0
      %2205 = vperm.xlu0 %2204, %v1519
      %v2206 = vpop.permute.xlu0 %2205
      %2209 = vset.pattern.permute.xlu0 0
      %2210 = vperm.xlu0 %2209, %v1520
      %v2211 = vpop.permute.xlu0 %2210
      %2214 = vset.pattern.permute.xlu0 0
      %2215 = vperm.xlu0 %2214, %v1521
      %v2216 = vpop.permute.xlu0 %2215
      %2219 = vset.pattern.permute.xlu0 0
      %2220 = vperm.xlu0 %2219, %v1522
      %v2221 = vpop.permute.xlu0 %2220
      %2224 = vset.pattern.permute.xlu0 0
      %2225 = vperm.xlu0 %2224, %v1523
      %v2226 = vpop.permute.xlu0 %2225
      %2229 = vset.pattern.permute.xlu0 0
      %2230 = vperm.xlu0 %2229, %v1524
      %v2231 = vpop.permute.xlu0 %2230
      %2234 = vset.pattern.permute.xlu0 0
      %2235 = vperm.xlu0 %2234, %v1525
      %v2236 = vpop.permute.xlu0 %2235
      %2239 = vset.pattern.permute.xlu0 0
      %2240 = vperm.xlu0 %2239, %v1526
      %v2241 = vpop.permute.xlu0 %2240
      %2244 = vset.pattern.permute.xlu0 0
      %2245 = vperm.xlu0 %2244, %v1527
      %v2246 = vpop.permute.xlu0 %2245
      %2249 = vset.pattern.permute.xlu0 0
      %2250 = vperm.xlu0 %2249, %v1528
      %v2251 = vpop.permute.xlu0 %2250
      %2254 = vset.pattern.permute.xlu0 0
      %2255 = vperm.xlu0 %2254, %v1529
      %v2256 = vpop.permute.xlu0 %2255
      %2259 = vset.pattern.permute.xlu0 0
      %2260 = vperm.xlu0 %2259, %v1530
      %v2261 = vpop.permute.xlu0 %2260
      %2264 = vset.pattern.permute.xlu0 0
      %2265 = vperm.xlu0 %2264, %v1531
      %v2266 = vpop.permute.xlu0 %2265
      %2269 = vset.pattern.permute.xlu0 0
      %2270 = vperm.xlu0 %2269, %v1532
      %v2271 = vpop.permute.xlu0 %2270
      %2274 = vset.pattern.permute.xlu0 0
      %2275 = vperm.xlu0 %2274, %v1533
      %v2276 = vpop.permute.xlu0 %2275
      %2279 = vset.pattern.permute.xlu0 0
      %2280 = vperm.xlu0 %2279, %v1534
      %v2281 = vpop.permute.xlu0 %2280
      %v2283 = vmul.f32 %v174, %v1946
      %v2284 = vmul.f32 %v175, %v1946
      %v2285 = vmul.f32 %v176, %v1951
      %v2286 = vmul.f32 %v177, %v1951
      %v2287 = vmul.f32 %v178, %v1956
      %v2288 = vmul.f32 %v179, %v1956
      %v2289 = vmul.f32 %v180, %v1961
      %v2290 = vmul.f32 %v181, %v1961
      %v2291 = vmul.f32 %v182, %v1966
      %v2292 = vmul.f32 %v183, %v1966
      %v2293 = vmul.f32 %v184, %v1971
      %v2294 = vmul.f32 %v185, %v1971
      %v2295 = vmul.f32 %v186, %v1976
      %v2296 = vmul.f32 %v187, %v1976
      %v2297 = vmul.f32 %v188, %v1981
      %v2298 = vmul.f32 %v189, %v1981
      %v2299 = vmul.f32 %v190, %v1986
      %v2300 = vmul.f32 %v191, %v1986
      %v2301 = vmul.f32 %v192, %v1991
      %v2302 = vmul.f32 %v193, %v1991
      %v2303 = vmul.f32 %v194, %v1996
      %v2304 = vmul.f32 %v195, %v1996
      %v2305 = vmul.f32 %v196, %v2001
      %v2306 = vmul.f32 %v197, %v2001
      %v2307 = vmul.f32 %v198, %v2006
      %v2308 = vmul.f32 %v199, %v2006
      %v2309 = vmul.f32 %v200, %v2011
      %v2310 = vmul.f32 %v201, %v2011
      %v2311 = vmul.f32 %v202, %v2016
      %v2312 = vmul.f32 %v203, %v2016
      %v2313 = vmul.f32 %v204, %v2021
      %v2314 = vmul.f32 %v205, %v2021
      %v2315 = vmul.f32 %v206, %v2026
      %v2316 = vmul.f32 %v207, %v2026
      %v2317 = vmul.f32 %v208, %v2031
      %v2318 = vmul.f32 %v209, %v2031
      %v2319 = vmul.f32 %v210, %v2036
      %v2320 = vmul.f32 %v211, %v2036
      %v2321 = vmul.f32 %v212, %v2041
      %v2322 = vmul.f32 %v213, %v2041
      %v2323 = vmul.f32 %v214, %v2046
      %v2324 = vmul.f32 %v215, %v2046
      %v2325 = vmul.f32 %v216, %v2051
      %v2326 = vmul.f32 %v217, %v2051
      %v2327 = vmul.f32 %v218, %v2056
      %v2328 = vmul.f32 %v219, %v2056
      %v2329 = vmul.f32 %v220, %v2061
      %v2330 = vmul.f32 %v221, %v2061
      %v2331 = vmul.f32 %v222, %v2066
      %v2332 = vmul.f32 %v223, %v2066
      %v2333 = vmul.f32 %v224, %v2071
      %v2334 = vmul.f32 %v225, %v2071
      %v2335 = vmul.f32 %v226, %v2076
      %v2336 = vmul.f32 %v227, %v2076
      %v2337 = vmul.f32 %v228, %v2081
      %v2338 = vmul.f32 %v229, %v2081
      %v2339 = vmul.f32 %v230, %v2086
      %v2340 = vmul.f32 %v231, %v2086
      %v2341 = vmul.f32 %v232, %v2091
      %v2342 = vmul.f32 %v233, %v2091
      %v2343 = vmul.f32 %v234, %v2096
      %v2344 = vmul.f32 %v235, %v2096
      %v2345 = vmul.f32 %v236, %v2101
      %v2346 = vmul.f32 %v237, %v2101
      %v2347 = vmul.f32 %v238, %v2106
      %v2348 = vmul.f32 %v239, %v2106
      %v2349 = vmul.f32 %v240, %v2111
      %v2350 = vmul.f32 %v241, %v2111
      %v2351 = vmul.f32 %v242, %v2116
      %v2352 = vmul.f32 %v243, %v2116
      %v2353 = vmul.f32 %v244, %v2121
      %v2354 = vmul.f32 %v245, %v2121
      %v2355 = vmul.f32 %v246, %v2126
      %v2356 = vmul.f32 %v247, %v2126
      %v2357 = vmul.f32 %v248, %v2131
      %v2358 = vmul.f32 %v249, %v2131
      %v2359 = vmul.f32 %v250, %v2136
      %v2360 = vmul.f32 %v251, %v2136
      %v2361 = vmul.f32 %v252, %v2141
      %v2362 = vmul.f32 %v253, %v2141
      %v2363 = vmul.f32 %v254, %v2146
      %v2364 = vmul.f32 %v255, %v2146
      %v2365 = vmul.f32 %v256, %v2151
      %v2366 = vmul.f32 %v257, %v2151
      %v2367 = vmul.f32 %v258, %v2156
      %v2368 = vmul.f32 %v259, %v2156
      %v2369 = vmul.f32 %v260, %v2161
      %v2370 = vmul.f32 %v261, %v2161
      %v2371 = vmul.f32 %v262, %v2166
      %v2372 = vmul.f32 %v263, %v2166
      %v2373 = vmul.f32 %v264, %v2171
      %v2374 = vmul.f32 %v265, %v2171
      %v2375 = vmul.f32 %v266, %v2176
      %v2376 = vmul.f32 %v267, %v2176
      %v2377 = vmul.f32 %v268, %v2181
      %v2378 = vmul.f32 %v269, %v2181
      %v2379 = vmul.f32 %v270, %v2186
      %v2380 = vmul.f32 %v271, %v2186
      %v2381 = vmul.f32 %v272, %v2191
      %v2382 = vmul.f32 %v273, %v2191
      %v2383 = vmul.f32 %v274, %v2196
      %v2384 = vmul.f32 %v275, %v2196
      %v2385 = vmul.f32 %v276, %v2201
      %v2386 = vmul.f32 %v277, %v2201
      %v2387 = vmul.f32 %v278, %v2206
      %v2388 = vmul.f32 %v279, %v2206
      %v2389 = vmul.f32 %v280, %v2211
      %v2390 = vmul.f32 %v281, %v2211
      %v2391 = vmul.f32 %v282, %v2216
      %v2392 = vmul.f32 %v283, %v2216
      %v2393 = vmul.f32 %v284, %v2221
      %v2394 = vmul.f32 %v285, %v2221
      %v2395 = vmul.f32 %v286, %v2226
      %v2396 = vmul.f32 %v287, %v2226
      %v2397 = vmul.f32 %v288, %v2231
      %v2398 = vmul.f32 %v289, %v2231
      %v2399 = vmul.f32 %v290, %v2236
      %v2400 = vmul.f32 %v291, %v2236
      %v2401 = vmul.f32 %v292, %v2241
      %v2402 = vmul.f32 %v293, %v2241
      %v2403 = vmul.f32 %v294, %v2246
      %v2404 = vmul.f32 %v295, %v2246
      %v2405 = vmul.f32 %v296, %v2251
      %v2406 = vmul.f32 %v297, %v2251
      %v2407 = vmul.f32 %v298, %v2256
      %v2408 = vmul.f32 %v299, %v2256
      %v2409 = vmul.f32 %v300, %v2261
      %v2410 = vmul.f32 %v301, %v2261
      %v2411 = vmul.f32 %v302, %v2266
      %v2412 = vmul.f32 %v303, %v2266
      %v2413 = vmul.f32 %v304, %v2271
      %v2414 = vmul.f32 %v305, %v2271
      %v2415 = vmul.f32 %v306, %v2276
      %v2416 = vmul.f32 %v307, %v2276
      %v2417 = vmul.f32 %v308, %v2281
      %v2418 = vmul.f32 %v309, %v2281
      %2420 = vset.pattern.permute.xlu0 1
      %2421 = vperm.xlu0 %2420, %v1875
      %v2422 = vpop.permute.xlu0 %2421
      %2425 = vset.pattern.permute.xlu0 1
      %2426 = vperm.xlu0 %2425, %v1876
      %v2427 = vpop.permute.xlu0 %2426
      %2430 = vset.pattern.permute.xlu0 1
      %2431 = vperm.xlu0 %2430, %v1877
      %v2432 = vpop.permute.xlu0 %2431
      %2435 = vset.pattern.permute.xlu0 1
      %2436 = vperm.xlu0 %2435, %v1878
      %v2437 = vpop.permute.xlu0 %2436
      %2440 = vset.pattern.permute.xlu0 1
      %2441 = vperm.xlu0 %2440, %v1879
      %v2442 = vpop.permute.xlu0 %2441
      %2445 = vset.pattern.permute.xlu0 1
      %2446 = vperm.xlu0 %2445, %v1880
      %v2447 = vpop.permute.xlu0 %2446
      %2450 = vset.pattern.permute.xlu0 1
      %2451 = vperm.xlu0 %2450, %v1881
      %v2452 = vpop.permute.xlu0 %2451
      %2455 = vset.pattern.permute.xlu0 1
      %2456 = vperm.xlu0 %2455, %v1882
      %v2457 = vpop.permute.xlu0 %2456
      %2460 = vset.pattern.permute.xlu0 1
      %2461 = vperm.xlu0 %2460, %v1883
      %v2462 = vpop.permute.xlu0 %2461
      %2465 = vset.pattern.permute.xlu0 1
      %2466 = vperm.xlu0 %2465, %v1884
      %v2467 = vpop.permute.xlu0 %2466
      %2470 = vset.pattern.permute.xlu0 1
      %2471 = vperm.xlu0 %2470, %v1885
      %v2472 = vpop.permute.xlu0 %2471
      %2475 = vset.pattern.permute.xlu0 1
      %2476 = vperm.xlu0 %2475, %v1886
      %v2477 = vpop.permute.xlu0 %2476
      %2480 = vset.pattern.permute.xlu0 1
      %2481 = vperm.xlu0 %2480, %v1887
      %v2482 = vpop.permute.xlu0 %2481
      %2485 = vset.pattern.permute.xlu0 1
      %2486 = vperm.xlu0 %2485, %v1888
      %v2487 = vpop.permute.xlu0 %2486
      %2490 = vset.pattern.permute.xlu0 1
      %2491 = vperm.xlu0 %2490, %v1889
      %v2492 = vpop.permute.xlu0 %2491
      %2495 = vset.pattern.permute.xlu0 1
      %2496 = vperm.xlu0 %2495, %v1890
      %v2497 = vpop.permute.xlu0 %2496
      %2500 = vset.pattern.permute.xlu0 1
      %2501 = vperm.xlu0 %2500, %v1891
      %v2502 = vpop.permute.xlu0 %2501
      %2505 = vset.pattern.permute.xlu0 1
      %2506 = vperm.xlu0 %2505, %v1892
      %v2507 = vpop.permute.xlu0 %2506
      %2510 = vset.pattern.permute.xlu0 1
      %2511 = vperm.xlu0 %2510, %v1893
      %v2512 = vpop.permute.xlu0 %2511
      %2515 = vset.pattern.permute.xlu0 1
      %2516 = vperm.xlu0 %2515, %v1894
      %v2517 = vpop.permute.xlu0 %2516
      %2520 = vset.pattern.permute.xlu0 1
      %2521 = vperm.xlu0 %2520, %v1895
      %v2522 = vpop.permute.xlu0 %2521
      %2525 = vset.pattern.permute.xlu0 1
      %2526 = vperm.xlu0 %2525, %v1896
      %v2527 = vpop.permute.xlu0 %2526
      %2530 = vset.pattern.permute.xlu0 1
      %2531 = vperm.xlu0 %2530, %v1897
      %v2532 = vpop.permute.xlu0 %2531
      %2535 = vset.pattern.permute.xlu0 1
      %2536 = vperm.xlu0 %2535, %v1898
      %v2537 = vpop.permute.xlu0 %2536
      %2540 = vset.pattern.permute.xlu0 1
      %2541 = vperm.xlu0 %2540, %v1899
      %v2542 = vpop.permute.xlu0 %2541
      %2545 = vset.pattern.permute.xlu0 1
      %2546 = vperm.xlu0 %2545, %v1900
      %v2547 = vpop.permute.xlu0 %2546
      %2550 = vset.pattern.permute.xlu0 1
      %2551 = vperm.xlu0 %2550, %v1901
      %v2552 = vpop.permute.xlu0 %2551
      %2555 = vset.pattern.permute.xlu0 1
      %2556 = vperm.xlu0 %2555, %v1902
      %v2557 = vpop.permute.xlu0 %2556
      %2560 = vset.pattern.permute.xlu0 1
      %2561 = vperm.xlu0 %2560, %v1903
      %v2562 = vpop.permute.xlu0 %2561
      %2565 = vset.pattern.permute.xlu0 1
      %2566 = vperm.xlu0 %2565, %v1904
      %v2567 = vpop.permute.xlu0 %2566
      %2570 = vset.pattern.permute.xlu0 1
      %2571 = vperm.xlu0 %2570, %v1905
      %v2572 = vpop.permute.xlu0 %2571
      %2575 = vset.pattern.permute.xlu0 1
      %2576 = vperm.xlu0 %2575, %v1906
      %v2577 = vpop.permute.xlu0 %2576
      %2580 = vset.pattern.permute.xlu0 1
      %2581 = vperm.xlu0 %2580, %v1907
      %v2582 = vpop.permute.xlu0 %2581
      %2585 = vset.pattern.permute.xlu0 1
      %2586 = vperm.xlu0 %2585, %v1908
      %v2587 = vpop.permute.xlu0 %2586
      %2590 = vset.pattern.permute.xlu0 1
      %2591 = vperm.xlu0 %2590, %v1909
      %v2592 = vpop.permute.xlu0 %2591
      %2595 = vset.pattern.permute.xlu0 1
      %2596 = vperm.xlu0 %2595, %v1910
      %v2597 = vpop.permute.xlu0 %2596
      %2600 = vset.pattern.permute.xlu0 1
      %2601 = vperm.xlu0 %2600, %v1911
      %v2602 = vpop.permute.xlu0 %2601
      %2605 = vset.pattern.permute.xlu0 1
      %2606 = vperm.xlu0 %2605, %v1912
      %v2607 = vpop.permute.xlu0 %2606
      %2610 = vset.pattern.permute.xlu0 1
      %2611 = vperm.xlu0 %2610, %v1913
      %v2612 = vpop.permute.xlu0 %2611
      %2615 = vset.pattern.permute.xlu0 1
      %2616 = vperm.xlu0 %2615, %v1914
      %v2617 = vpop.permute.xlu0 %2616
      %2620 = vset.pattern.permute.xlu0 1
      %2621 = vperm.xlu0 %2620, %v1915
      %v2622 = vpop.permute.xlu0 %2621
      %2625 = vset.pattern.permute.xlu0 1
      %2626 = vperm.xlu0 %2625, %v1916
      %v2627 = vpop.permute.xlu0 %2626
      %2630 = vset.pattern.permute.xlu0 1
      %2631 = vperm.xlu0 %2630, %v1917
      %v2632 = vpop.permute.xlu0 %2631
      %2635 = vset.pattern.permute.xlu0 1
      %2636 = vperm.xlu0 %2635, %v1918
      %v2637 = vpop.permute.xlu0 %2636
      %2640 = vset.pattern.permute.xlu0 1
      %2641 = vperm.xlu0 %2640, %v1919
      %v2642 = vpop.permute.xlu0 %2641
      %2645 = vset.pattern.permute.xlu0 1
      %2646 = vperm.xlu0 %2645, %v1920
      %v2647 = vpop.permute.xlu0 %2646
      %2650 = vset.pattern.permute.xlu0 1
      %2651 = vperm.xlu0 %2650, %v1921
      %v2652 = vpop.permute.xlu0 %2651
      %2655 = vset.pattern.permute.xlu0 1
      %2656 = vperm.xlu0 %2655, %v1922
      %v2657 = vpop.permute.xlu0 %2656
      %2660 = vset.pattern.permute.xlu0 1
      %2661 = vperm.xlu0 %2660, %v1923
      %v2662 = vpop.permute.xlu0 %2661
      %2665 = vset.pattern.permute.xlu0 1
      %2666 = vperm.xlu0 %2665, %v1924
      %v2667 = vpop.permute.xlu0 %2666
      %2670 = vset.pattern.permute.xlu0 1
      %2671 = vperm.xlu0 %2670, %v1925
      %v2672 = vpop.permute.xlu0 %2671
      %2675 = vset.pattern.permute.xlu0 1
      %2676 = vperm.xlu0 %2675, %v1926
      %v2677 = vpop.permute.xlu0 %2676
      %2680 = vset.pattern.permute.xlu0 1
      %2681 = vperm.xlu0 %2680, %v1927
      %v2682 = vpop.permute.xlu0 %2681
      %2685 = vset.pattern.permute.xlu0 1
      %2686 = vperm.xlu0 %2685, %v1928
      %v2687 = vpop.permute.xlu0 %2686
      %2690 = vset.pattern.permute.xlu0 1
      %2691 = vperm.xlu0 %2690, %v1929
      %v2692 = vpop.permute.xlu0 %2691
      %2695 = vset.pattern.permute.xlu0 1
      %2696 = vperm.xlu0 %2695, %v1930
      %v2697 = vpop.permute.xlu0 %2696
      %2700 = vset.pattern.permute.xlu0 1
      %2701 = vperm.xlu0 %2700, %v1931
      %v2702 = vpop.permute.xlu0 %2701
      %2705 = vset.pattern.permute.xlu0 1
      %2706 = vperm.xlu0 %2705, %v1932
      %v2707 = vpop.permute.xlu0 %2706
      %2710 = vset.pattern.permute.xlu0 1
      %2711 = vperm.xlu0 %2710, %v1933
      %v2712 = vpop.permute.xlu0 %2711
      %2715 = vset.pattern.permute.xlu0 1
      %2716 = vperm.xlu0 %2715, %v1934
      %v2717 = vpop.permute.xlu0 %2716
      %2720 = vset.pattern.permute.xlu0 1
      %2721 = vperm.xlu0 %2720, %v1935
      %v2722 = vpop.permute.xlu0 %2721
      %2725 = vset.pattern.permute.xlu0 1
      %2726 = vperm.xlu0 %2725, %v1936
      %v2727 = vpop.permute.xlu0 %2726
      %2730 = vset.pattern.permute.xlu0 1
      %2731 = vperm.xlu0 %2730, %v1937
      %v2732 = vpop.permute.xlu0 %2731
      %2735 = vset.pattern.permute.xlu0 1
      %2736 = vperm.xlu0 %2735, %v1938
      %v2737 = vpop.permute.xlu0 %2736
      %2740 = vset.pattern.permute.xlu0 1
      %2741 = vperm.xlu0 %2740, %v1939
      %v2742 = vpop.permute.xlu0 %2741
      %2745 = vset.pattern.permute.xlu0 1
      %2746 = vperm.xlu0 %2745, %v1940
      %v2747 = vpop.permute.xlu0 %2746
      %2750 = vset.pattern.permute.xlu0 1
      %2751 = vperm.xlu0 %2750, %v1941
      %v2752 = vpop.permute.xlu0 %2751
      %2755 = vset.pattern.permute.xlu0 1
      %2756 = vperm.xlu0 %2755, %v1942
      %v2757 = vpop.permute.xlu0 %2756
      %v2759 = vadd.f32 %v2283, %v2422
      %v2760 = vadd.f32 %v2284, %v2422
      %v2761 = vadd.f32 %v2285, %v2427
      %v2762 = vadd.f32 %v2286, %v2427
      %v2763 = vadd.f32 %v2287, %v2432
      %v2764 = vadd.f32 %v2288, %v2432
      %v2765 = vadd.f32 %v2289, %v2437
      %v2766 = vadd.f32 %v2290, %v2437
      %v2767 = vadd.f32 %v2291, %v2442
      %v2768 = vadd.f32 %v2292, %v2442
      %v2769 = vadd.f32 %v2293, %v2447
      %v2770 = vadd.f32 %v2294, %v2447
      %v2771 = vadd.f32 %v2295, %v2452
      %v2772 = vadd.f32 %v2296, %v2452
      %v2773 = vadd.f32 %v2297, %v2457
      %v2774 = vadd.f32 %v2298, %v2457
      %v2775 = vadd.f32 %v2299, %v2462
      %v2776 = vadd.f32 %v2300, %v2462
      %v2777 = vadd.f32 %v2301, %v2467
      %v2778 = vadd.f32 %v2302, %v2467
      %v2779 = vadd.f32 %v2303, %v2472
      %v2780 = vadd.f32 %v2304, %v2472
      %v2781 = vadd.f32 %v2305, %v2477
      %v2782 = vadd.f32 %v2306, %v2477
      %v2783 = vadd.f32 %v2307, %v2482
      %v2784 = vadd.f32 %v2308, %v2482
      %v2785 = vadd.f32 %v2309, %v2487
      %v2786 = vadd.f32 %v2310, %v2487
      %v2787 = vadd.f32 %v2311, %v2492
      %v2788 = vadd.f32 %v2312, %v2492
      %v2789 = vadd.f32 %v2313, %v2497
      %v2790 = vadd.f32 %v2314, %v2497
      %v2791 = vadd.f32 %v2315, %v2502
      %v2792 = vadd.f32 %v2316, %v2502
      %v2793 = vadd.f32 %v2317, %v2507
      %v2794 = vadd.f32 %v2318, %v2507
      %v2795 = vadd.f32 %v2319, %v2512
      %v2796 = vadd.f32 %v2320, %v2512
      %v2797 = vadd.f32 %v2321, %v2517
      %v2798 = vadd.f32 %v2322, %v2517
      %v2799 = vadd.f32 %v2323, %v2522
      %v2800 = vadd.f32 %v2324, %v2522
      %v2801 = vadd.f32 %v2325, %v2527
      %v2802 = vadd.f32 %v2326, %v2527
      %v2803 = vadd.f32 %v2327, %v2532
      %v2804 = vadd.f32 %v2328, %v2532
      %v2805 = vadd.f32 %v2329, %v2537
      %v2806 = vadd.f32 %v2330, %v2537
      %v2807 = vadd.f32 %v2331, %v2542
      %v2808 = vadd.f32 %v2332, %v2542
      %v2809 = vadd.f32 %v2333, %v2547
      %v2810 = vadd.f32 %v2334, %v2547
      %v2811 = vadd.f32 %v2335, %v2552
      %v2812 = vadd.f32 %v2336, %v2552
      %v2813 = vadd.f32 %v2337, %v2557
      %v2814 = vadd.f32 %v2338, %v2557
      %v2815 = vadd.f32 %v2339, %v2562
      %v2816 = vadd.f32 %v2340, %v2562
      %v2817 = vadd.f32 %v2341, %v2567
      %v2818 = vadd.f32 %v2342, %v2567
      %v2819 = vadd.f32 %v2343, %v2572
      %v2820 = vadd.f32 %v2344, %v2572
      %v2821 = vadd.f32 %v2345, %v2577
      %v2822 = vadd.f32 %v2346, %v2577
      %v2823 = vadd.f32 %v2347, %v2582
      %v2824 = vadd.f32 %v2348, %v2582
      %v2825 = vadd.f32 %v2349, %v2587
      %v2826 = vadd.f32 %v2350, %v2587
      %v2827 = vadd.f32 %v2351, %v2592
      %v2828 = vadd.f32 %v2352, %v2592
      %v2829 = vadd.f32 %v2353, %v2597
      %v2830 = vadd.f32 %v2354, %v2597
      %v2831 = vadd.f32 %v2355, %v2602
      %v2832 = vadd.f32 %v2356, %v2602
      %v2833 = vadd.f32 %v2357, %v2607
      %v2834 = vadd.f32 %v2358, %v2607
      %v2835 = vadd.f32 %v2359, %v2612
      %v2836 = vadd.f32 %v2360, %v2612
      %v2837 = vadd.f32 %v2361, %v2617
      %v2838 = vadd.f32 %v2362, %v2617
      %v2839 = vadd.f32 %v2363, %v2622
      %v2840 = vadd.f32 %v2364, %v2622
      %v2841 = vadd.f32 %v2365, %v2627
      %v2842 = vadd.f32 %v2366, %v2627
      %v2843 = vadd.f32 %v2367, %v2632
      %v2844 = vadd.f32 %v2368, %v2632
      %v2845 = vadd.f32 %v2369, %v2637
      %v2846 = vadd.f32 %v2370, %v2637
      %v2847 = vadd.f32 %v2371, %v2642
      %v2848 = vadd.f32 %v2372, %v2642
      %v2849 = vadd.f32 %v2373, %v2647
      %v2850 = vadd.f32 %v2374, %v2647
      %v2851 = vadd.f32 %v2375, %v2652
      %v2852 = vadd.f32 %v2376, %v2652
      %v2853 = vadd.f32 %v2377, %v2657
      %v2854 = vadd.f32 %v2378, %v2657
      %v2855 = vadd.f32 %v2379, %v2662
      %v2856 = vadd.f32 %v2380, %v2662
      %v2857 = vadd.f32 %v2381, %v2667
      %v2858 = vadd.f32 %v2382, %v2667
      %v2859 = vadd.f32 %v2383, %v2672
      %v2860 = vadd.f32 %v2384, %v2672
      %v2861 = vadd.f32 %v2385, %v2677
      %v2862 = vadd.f32 %v2386, %v2677
      %v2863 = vadd.f32 %v2387, %v2682
      %v2864 = vadd.f32 %v2388, %v2682
      %v2865 = vadd.f32 %v2389, %v2687
      %v2866 = vadd.f32 %v2390, %v2687
      %v2867 = vadd.f32 %v2391, %v2692
      %v2868 = vadd.f32 %v2392, %v2692
      %v2869 = vadd.f32 %v2393, %v2697
      %v2870 = vadd.f32 %v2394, %v2697
      %v2871 = vadd.f32 %v2395, %v2702
      %v2872 = vadd.f32 %v2396, %v2702
      %v2873 = vadd.f32 %v2397, %v2707
      %v2874 = vadd.f32 %v2398, %v2707
      %v2875 = vadd.f32 %v2399, %v2712
      %v2876 = vadd.f32 %v2400, %v2712
      %v2877 = vadd.f32 %v2401, %v2717
      %v2878 = vadd.f32 %v2402, %v2717
      %v2879 = vadd.f32 %v2403, %v2722
      %v2880 = vadd.f32 %v2404, %v2722
      %v2881 = vadd.f32 %v2405, %v2727
      %v2882 = vadd.f32 %v2406, %v2727
      %v2883 = vadd.f32 %v2407, %v2732
      %v2884 = vadd.f32 %v2408, %v2732
      %v2885 = vadd.f32 %v2409, %v2737
      %v2886 = vadd.f32 %v2410, %v2737
      %v2887 = vadd.f32 %v2411, %v2742
      %v2888 = vadd.f32 %v2412, %v2742
      %v2889 = vadd.f32 %v2413, %v2747
      %v2890 = vadd.f32 %v2414, %v2747
      %v2891 = vadd.f32 %v2415, %v2752
      %v2892 = vadd.f32 %v2416, %v2752
      %v2893 = vadd.f32 %v2417, %v2757
      %v2894 = vadd.f32 %v2418, %v2757
      %v2895 = vmax.f32 %v2759, 0.0
      %v2896 = vmax.f32 %v2760, 0.0
      %v2897 = vmax.f32 %v2761, 0.0
      %v2898 = vmax.f32 %v2762, 0.0
      %v2899 = vmax.f32 %v2763, 0.0
      %v2900 = vmax.f32 %v2764, 0.0
      %v2901 = vmax.f32 %v2765, 0.0
      %v2902 = vmax.f32 %v2766, 0.0
      %v2903 = vmax.f32 %v2767, 0.0
      %v2904 = vmax.f32 %v2768, 0.0
      %v2905 = vmax.f32 %v2769, 0.0
      %v2906 = vmax.f32 %v2770, 0.0
      %v2907 = vmax.f32 %v2771, 0.0
      %v2908 = vmax.f32 %v2772, 0.0
      %v2909 = vmax.f32 %v2773, 0.0
      %v2910 = vmax.f32 %v2774, 0.0
      %v2911 = vmax.f32 %v2775, 0.0
      %v2912 = vmax.f32 %v2776, 0.0
      %v2913 = vmax.f32 %v2777, 0.0
      %v2914 = vmax.f32 %v2778, 0.0
      %v2915 = vmax.f32 %v2779, 0.0
      %v2916 = vmax.f32 %v2780, 0.0
      %v2917 = vmax.f32 %v2781, 0.0
      %v2918 = vmax.f32 %v2782, 0.0
      %v2919 = vmax.f32 %v2783, 0.0
      %v2920 = vmax.f32 %v2784, 0.0
      %v2921 = vmax.f32 %v2785, 0.0
      %v2922 = vmax.f32 %v2786, 0.0
      %v2923 = vmax.f32 %v2787, 0.0
      %v2924 = vmax.f32 %v2788, 0.0
      %v2925 = vmax.f32 %v2789, 0.0
      %v2926 = vmax.f32 %v2790, 0.0
      %v2927 = vmax.f32 %v2791, 0.0
      %v2928 = vmax.f32 %v2792, 0.0
      %v2929 = vmax.f32 %v2793, 0.0
      %v2930 = vmax.f32 %v2794, 0.0
      %v2931 = vmax.f32 %v2795, 0.0
      %v2932 = vmax.f32 %v2796, 0.0
      %v2933 = vmax.f32 %v2797, 0.0
      %v2934 = vmax.f32 %v2798, 0.0
      %v2935 = vmax.f32 %v2799, 0.0
      %v2936 = vmax.f32 %v2800, 0.0
      %v2937 = vmax.f32 %v2801, 0.0
      %v2938 = vmax.f32 %v2802, 0.0
      %v2939 = vmax.f32 %v2803, 0.0
      %v2940 = vmax.f32 %v2804, 0.0
      %v2941 = vmax.f32 %v2805, 0.0
      %v2942 = vmax.f32 %v2806, 0.0
      %v2943 = vmax.f32 %v2807, 0.0
      %v2944 = vmax.f32 %v2808, 0.0
      %v2945 = vmax.f32 %v2809, 0.0
      %v2946 = vmax.f32 %v2810, 0.0
      %v2947 = vmax.f32 %v2811, 0.0
      %v2948 = vmax.f32 %v2812, 0.0
      %v2949 = vmax.f32 %v2813, 0.0
      %v2950 = vmax.f32 %v2814, 0.0
      %v2951 = vmax.f32 %v2815, 0.0
      %v2952 = vmax.f32 %v2816, 0.0
      %v2953 = vmax.f32 %v2817, 0.0
      %v2954 = vmax.f32 %v2818, 0.0
      %v2955 = vmax.f32 %v2819, 0.0
      %v2956 = vmax.f32 %v2820, 0.0
      %v2957 = vmax.f32 %v2821, 0.0
      %v2958 = vmax.f32 %v2822, 0.0
      %v2959 = vmax.f32 %v2823, 0.0
      %v2960 = vmax.f32 %v2824, 0.0
      %v2961 = vmax.f32 %v2825, 0.0
      %v2962 = vmax.f32 %v2826, 0.0
      %v2963 = vmax.f32 %v2827, 0.0
      %v2964 = vmax.f32 %v2828, 0.0
      %v2965 = vmax.f32 %v2829, 0.0
      %v2966 = vmax.f32 %v2830, 0.0
      %v2967 = vmax.f32 %v2831, 0.0
      %v2968 = vmax.f32 %v2832, 0.0
      %v2969 = vmax.f32 %v2833, 0.0
      %v2970 = vmax.f32 %v2834, 0.0
      %v2971 = vmax.f32 %v2835, 0.0
      %v2972 = vmax.f32 %v2836, 0.0
      %v2973 = vmax.f32 %v2837, 0.0
      %v2974 = vmax.f32 %v2838, 0.0
      %v2975 = vmax.f32 %v2839, 0.0
      %v2976 = vmax.f32 %v2840, 0.0
      %v2977 = vmax.f32 %v2841, 0.0
      %v2978 = vmax.f32 %v2842, 0.0
      %v2979 = vmax.f32 %v2843, 0.0
      %v2980 = vmax.f32 %v2844, 0.0
      %v2981 = vmax.f32 %v2845, 0.0
      %v2982 = vmax.f32 %v2846, 0.0
      %v2983 = vmax.f32 %v2847, 0.0
      %v2984 = vmax.f32 %v2848, 0.0
      %v2985 = vmax.f32 %v2849, 0.0
      %v2986 = vmax.f32 %v2850, 0.0
      %v2987 = vmax.f32 %v2851, 0.0
      %v2988 = vmax.f32 %v2852, 0.0
      %v2989 = vmax.f32 %v2853, 0.0
      %v2990 = vmax.f32 %v2854, 0.0
      %v2991 = vmax.f32 %v2855, 0.0
      %v2992 = vmax.f32 %v2856, 0.0
      %v2993 = vmax.f32 %v2857, 0.0
      %v2994 = vmax.f32 %v2858, 0.0
      %v2995 = vmax.f32 %v2859, 0.0
      %v2996 = vmax.f32 %v2860, 0.0
      %v2997 = vmax.f32 %v2861, 0.0
      %v2998 = vmax.f32 %v2862, 0.0
      %v2999 = vmax.f32 %v2863, 0.0
      %v3000 = vmax.f32 %v2864, 0.0
      %v3001 = vmax.f32 %v2865, 0.0
      %v3002 = vmax.f32 %v2866, 0.0
      %v3003 = vmax.f32 %v2867, 0.0
      %v3004 = vmax.f32 %v2868, 0.0
      %v3005 = vmax.f32 %v2869, 0.0
      %v3006 = vmax.f32 %v2870, 0.0
      %v3007 = vmax.f32 %v2871, 0.0
      %v3008 = vmax.f32 %v2872, 0.0
      %v3009 = vmax.f32 %v2873, 0.0
      %v3010 = vmax.f32 %v2874, 0.0
      %v3011 = vmax.f32 %v2875, 0.0
      %v3012 = vmax.f32 %v2876, 0.0
      %v3013 = vmax.f32 %v2877, 0.0
      %v3014 = vmax.f32 %v2878, 0.0
      %v3015 = vmax.f32 %v2879, 0.0
      %v3016 = vmax.f32 %v2880, 0.0
      %v3017 = vmax.f32 %v2881, 0.0
      %v3018 = vmax.f32 %v2882, 0.0
      %v3019 = vmax.f32 %v2883, 0.0
      %v3020 = vmax.f32 %v2884, 0.0
      %v3021 = vmax.f32 %v2885, 0.0
      %v3022 = vmax.f32 %v2886, 0.0
      %v3023 = vmax.f32 %v2887, 0.0
      %v3024 = vmax.f32 %v2888, 0.0
      %v3025 = vmax.f32 %v2889, 0.0
      %v3026 = vmax.f32 %v2890, 0.0
      %v3027 = vmax.f32 %v2891, 0.0
      %v3028 = vmax.f32 %v2892, 0.0
      %v3029 = vmax.f32 %v2893, 0.0
      %v3030 = vmax.f32 %v2894, 0.0
      %3031 = vst [vmem:[%s172] sm:$0xff] %v2895
      %3032 = vst.msk [vmem:[%s172 + $0x8] sm:$0xff] %vm310, %v2896
      %3033 = vst [vmem:[%s172 + $0x10] sm:$0xff] %v2897
      %3034 = vst.msk [vmem:[%s172 + $0x18] sm:$0xff] %vm310, %v2898
      %3035 = vst [vmem:[%s172 + $0x20] sm:$0xff] %v2899
      %3036 = vst.msk [vmem:[%s172 + $0x28] sm:$0xff] %vm310, %v2900
      %3037 = vst [vmem:[%s172 + $0x30] sm:$0xff] %v2901
      %3038 = vst.msk [vmem:[%s172 + $0x38] sm:$0xff] %vm310, %v2902
      %3039 = vst [vmem:[%s172 + $0x40] sm:$0xff] %v2903
      %3040 = vst.msk [vmem:[%s172 + $0x48] sm:$0xff] %vm310, %v2904
      %3041 = vst [vmem:[%s172 + $0x50] sm:$0xff] %v2905
      %3042 = vst.msk [vmem:[%s172 + $0x58] sm:$0xff] %vm310, %v2906
      %3043 = vst [vmem:[%s172 + $0x60] sm:$0xff] %v2907
      %3044 = vst.msk [vmem:[%s172 + $0x68] sm:$0xff] %vm310, %v2908
      %3045 = vst [vmem:[%s172 + $0x70] sm:$0xff] %v2909
      %3046 = vst.msk [vmem:[%s172 + $0x78] sm:$0xff] %vm310, %v2910
      %3047 = vst [vmem:[%s172 + $0x80] sm:$0xff] %v2911
      %3048 = vst.msk [vmem:[%s172 + $0x88] sm:$0xff] %vm310, %v2912
      %3049 = vst [vmem:[%s172 + $0x90] sm:$0xff] %v2913
      %3050 = vst.msk [vmem:[%s172 + $0x98] sm:$0xff] %vm310, %v2914
      %3051 = vst [vmem:[%s172 + $0xa0] sm:$0xff] %v2915
      %3052 = vst.msk [vmem:[%s172 + $0xa8] sm:$0xff] %vm310, %v2916
      %3053 = vst [vmem:[%s172 + $0xb0] sm:$0xff] %v2917
      %3054 = vst.msk [vmem:[%s172 + $0xb8] sm:$0xff] %vm310, %v2918
      %3055 = vst [vmem:[%s172 + $0xc0] sm:$0xff] %v2919
      %3056 = vst.msk [vmem:[%s172 + $0xc8] sm:$0xff] %vm310, %v2920
      %3057 = vst [vmem:[%s172 + $0xd0] sm:$0xff] %v2921
      %3058 = vst.msk [vmem:[%s172 + $0xd8] sm:$0xff] %vm310, %v2922
      %3059 = vst [vmem:[%s172 + $0xe0] sm:$0xff] %v2923
      %3060 = vst.msk [vmem:[%s172 + $0xe8] sm:$0xff] %vm310, %v2924
      %3061 = vst [vmem:[%s172 + $0xf0] sm:$0xff] %v2925
      %3062 = vst.msk [vmem:[%s172 + $0xf8] sm:$0xff] %vm310, %v2926
      %3063 = vst [vmem:[%s172 + $0x100] sm:$0xff] %v2927
      %3064 = vst.msk [vmem:[%s172 + $0x108] sm:$0xff] %vm310, %v2928
      %3065 = vst [vmem:[%s172 + $0x110] sm:$0xff] %v2929
      %3066 = vst.msk [vmem:[%s172 + $0x118] sm:$0xff] %vm310, %v2930
      %3067 = vst [vmem:[%s172 + $0x120] sm:$0xff] %v2931
      %3068 = vst.msk [vmem:[%s172 + $0x128] sm:$0xff] %vm310, %v2932
      %3069 = vst [vmem:[%s172 + $0x130] sm:$0xff] %v2933
      %3070 = vst.msk [vmem:[%s172 + $0x138] sm:$0xff] %vm310, %v2934
      %3071 = vst [vmem:[%s172 + $0x140] sm:$0xff] %v2935
      %3072 = vst.msk [vmem:[%s172 + $0x148] sm:$0xff] %vm310, %v2936
      %3073 = vst [vmem:[%s172 + $0x150] sm:$0xff] %v2937
      %3074 = vst.msk [vmem:[%s172 + $0x158] sm:$0xff] %vm310, %v2938
      %3075 = vst [vmem:[%s172 + $0x160] sm:$0xff] %v2939
      %3076 = vst.msk [vmem:[%s172 + $0x168] sm:$0xff] %vm310, %v2940
      %3077 = vst [vmem:[%s172 + $0x170] sm:$0xff] %v2941
      %3078 = vst.msk [vmem:[%s172 + $0x178] sm:$0xff] %vm310, %v2942
      %3079 = vst [vmem:[%s172 + $0x180] sm:$0xff] %v2943
      %3080 = vst.msk [vmem:[%s172 + $0x188] sm:$0xff] %vm310, %v2944
      %3081 = vst [vmem:[%s172 + $0x190] sm:$0xff] %v2945
      %3082 = vst.msk [vmem:[%s172 + $0x198] sm:$0xff] %vm310, %v2946
      %3083 = vst [vmem:[%s172 + $0x1a0] sm:$0xff] %v2947
      %3084 = vst.msk [vmem:[%s172 + $0x1a8] sm:$0xff] %vm310, %v2948
      %3085 = vst [vmem:[%s172 + $0x1b0] sm:$0xff] %v2949
      %3086 = vst.msk [vmem:[%s172 + $0x1b8] sm:$0xff] %vm310, %v2950
      %3087 = vst [vmem:[%s172 + $0x1c0] sm:$0xff] %v2951
      %3088 = vst.msk [vmem:[%s172 + $0x1c8] sm:$0xff] %vm310, %v2952
      %3089 = vst [vmem:[%s172 + $0x1d0] sm:$0xff] %v2953
      %3090 = vst.msk [vmem:[%s172 + $0x1d8] sm:$0xff] %vm310, %v2954
      %3091 = vst [vmem:[%s172 + $0x1e0] sm:$0xff] %v2955
      %3092 = vst.msk [vmem:[%s172 + $0x1e8] sm:$0xff] %vm310, %v2956
      %3093 = vst [vmem:[%s172 + $0x1f0] sm:$0xff] %v2957
      %3094 = vst.msk [vmem:[%s172 + $0x1f8] sm:$0xff] %vm310, %v2958
      %3095 = vst [vmem:[%s172 + $0x200] sm:$0xff] %v2959
      %3096 = vst.msk [vmem:[%s172 + $0x208] sm:$0xff] %vm310, %v2960
      %3097 = vst [vmem:[%s172 + $0x210] sm:$0xff] %v2961
      %3098 = vst.msk [vmem:[%s172 + $0x218] sm:$0xff] %vm310, %v2962
      %3099 = vst [vmem:[%s172 + $0x220] sm:$0xff] %v2963
      %3100 = vst.msk [vmem:[%s172 + $0x228] sm:$0xff] %vm310, %v2964
      %3101 = vst [vmem:[%s172 + $0x230] sm:$0xff] %v2965
      %3102 = vst.msk [vmem:[%s172 + $0x238] sm:$0xff] %vm310, %v2966
      %3103 = vst [vmem:[%s172 + $0x240] sm:$0xff] %v2967
      %3104 = vst.msk [vmem:[%s172 + $0x248] sm:$0xff] %vm310, %v2968
      %3105 = vst [vmem:[%s172 + $0x250] sm:$0xff] %v2969
      %3106 = vst.msk [vmem:[%s172 + $0x258] sm:$0xff] %vm310, %v2970
      %3107 = vst [vmem:[%s172 + $0x260] sm:$0xff] %v2971
      %3108 = vst.msk [vmem:[%s172 + $0x268] sm:$0xff] %vm310, %v2972
      %3109 = vst [vmem:[%s172 + $0x270] sm:$0xff] %v2973
      %3110 = vst.msk [vmem:[%s172 + $0x278] sm:$0xff] %vm310, %v2974
      %3111 = vst [vmem:[%s172 + $0x280] sm:$0xff] %v2975
      %3112 = vst.msk [vmem:[%s172 + $0x288] sm:$0xff] %vm310, %v2976
      %3113 = vst [vmem:[%s172 + $0x290] sm:$0xff] %v2977
      %3114 = vst.msk [vmem:[%s172 + $0x298] sm:$0xff] %vm310, %v2978
      %3115 = vst [vmem:[%s172 + $0x2a0] sm:$0xff] %v2979
      %3116 = vst.msk [vmem:[%s172 + $0x2a8] sm:$0xff] %vm310, %v2980
      %3117 = vst [vmem:[%s172 + $0x2b0] sm:$0xff] %v2981
      %3118 = vst.msk [vmem:[%s172 + $0x2b8] sm:$0xff] %vm310, %v2982
      %3119 = vst [vmem:[%s172 + $0x2c0] sm:$0xff] %v2983
      %3120 = vst.msk [vmem:[%s172 + $0x2c8] sm:$0xff] %vm310, %v2984
      %3121 = vst [vmem:[%s172 + $0x2d0] sm:$0xff] %v2985
      %3122 = vst.msk [vmem:[%s172 + $0x2d8] sm:$0xff] %vm310, %v2986
      %3123 = vst [vmem:[%s172 + $0x2e0] sm:$0xff] %v2987
      %3124 = vst.msk [vmem:[%s172 + $0x2e8] sm:$0xff] %vm310, %v2988
      %3125 = vst [vmem:[%s172 + $0x2f0] sm:$0xff] %v2989
      %3126 = vst.msk [vmem:[%s172 + $0x2f8] sm:$0xff] %vm310, %v2990
      %3127 = vst [vmem:[%s172 + $0x300] sm:$0xff] %v2991
      %3128 = vst.msk [vmem:[%s172 + $0x308] sm:$0xff] %vm310, %v2992
      %3129 = vst [vmem:[%s172 + $0x310] sm:$0xff] %v2993
      %3130 = vst.msk [vmem:[%s172 + $0x318] sm:$0xff] %vm310, %v2994
      %3131 = vst [vmem:[%s172 + $0x320] sm:$0xff] %v2995
      %3132 = vst.msk [vmem:[%s172 + $0x328] sm:$0xff] %vm310, %v2996
      %3133 = vst [vmem:[%s172 + $0x330] sm:$0xff] %v2997
      %3134 = vst.msk [vmem:[%s172 + $0x338] sm:$0xff] %vm310, %v2998
      %3135 = vst [vmem:[%s172 + $0x340] sm:$0xff] %v2999
      %3136 = vst.msk [vmem:[%s172 + $0x348] sm:$0xff] %vm310, %v3000
      %3137 = vst [vmem:[%s172 + $0x350] sm:$0xff] %v3001
      %3138 = vst.msk [vmem:[%s172 + $0x358] sm:$0xff] %vm310, %v3002
      %3139 = vst [vmem:[%s172 + $0x360] sm:$0xff] %v3003
      %3140 = vst.msk [vmem:[%s172 + $0x368] sm:$0xff] %vm310, %v3004
      %3141 = vst [vmem:[%s172 + $0x370] sm:$0xff] %v3005
      %3142 = vst.msk [vmem:[%s172 + $0x378] sm:$0xff] %vm310, %v3006
      %3143 = vst [vmem:[%s172 + $0x380] sm:$0xff] %v3007
      %3144 = vst.msk [vmem:[%s172 + $0x388] sm:$0xff] %vm310, %v3008
      %3145 = vst [vmem:[%s172 + $0x390] sm:$0xff] %v3009
      %3146 = vst.msk [vmem:[%s172 + $0x398] sm:$0xff] %vm310, %v3010
      %3147 = vst [vmem:[%s172 + $0x3a0] sm:$0xff] %v3011
      %3148 = vst.msk [vmem:[%s172 + $0x3a8] sm:$0xff] %vm310, %v3012
      %3149 = vst [vmem:[%s172 + $0x3b0] sm:$0xff] %v3013
      %3150 = vst.msk [vmem:[%s172 + $0x3b8] sm:$0xff] %vm310, %v3014
      %3151 = vst [vmem:[%s172 + $0x3c0] sm:$0xff] %v3015
      %3152 = vst.msk [vmem:[%s172 + $0x3c8] sm:$0xff] %vm310, %v3016
      %3153 = vst [vmem:[%s172 + $0x3d0] sm:$0xff] %v3017
      %3154 = vst.msk [vmem:[%s172 + $0x3d8] sm:$0xff] %vm310, %v3018
      %3155 = vst [vmem:[%s172 + $0x3e0] sm:$0xff] %v3019
      %3156 = vst.msk [vmem:[%s172 + $0x3e8] sm:$0xff] %vm310, %v3020
      %3157 = vst [vmem:[%s172 + $0x3f0] sm:$0xff] %v3021
      %3158 = vst.msk [vmem:[%s172 + $0x3f8] sm:$0xff] %vm310, %v3022
      %3159 = vst [vmem:[%s172 + $0x400] sm:$0xff] %v3023
      %3160 = vst.msk [vmem:[%s172 + $0x408] sm:$0xff] %vm310, %v3024
      %3161 = vst [vmem:[%s172 + $0x410] sm:$0xff] %v3025
      %3162 = vst.msk [vmem:[%s172 + $0x418] sm:$0xff] %vm310, %v3026
      %3163 = vst [vmem:[%s172 + $0x420] sm:$0xff] %v3027
      %3164 = vst.msk [vmem:[%s172 + $0x428] sm:$0xff] %vm310, %v3028
      %3165 = vst [vmem:[%s172 + $0x430] sm:$0xff] %v3029
      %3166 = vst.msk [vmem:[%s172 + $0x438] sm:$0xff] %vm310, %v3030
      %s3167 = smul.u32 68, %s13
      %p3168 = scmp.lt.s32.totalorder %s3167, 135
      %s3169 = scalar_select %p3168, %s3167, 135
      %s3170 = smul.addr %s3169, 2
      %s3171 = smul.addr %s3170, 8
      %s3172 = scalar_lea.vmem %s2, %s3171
      // Predicated region
      $region29: #{tpu_custom_call.1} parent=27 // pred_check
        %p3173 = pneg %p83
      $region30: #{tpu_custom_call.1} parent=27 // pred_check_branch
        %3175 = sbr.rel (%p3173) target = $region32
      $region31: #{tpu_custom_call.1} parent=27 // pred_region
        %s3176 = smul.u32 68, %s13
      $region32: #{tpu_custom_call.1} parent=27 // pred_fallthru
        _
    $region28: #{tpu_custom_call.1} parent=5 // pred_fallthru
      _
    %p3177 = scmp.le.s32.totalorder 2, %s8
    // Predicated region
    $region33: #{tpu_custom_call.1} parent=5 // pred_check
      %p3178 = pneg %p3177
    $region34: #{tpu_custom_call.1} parent=5 // pred_check_branch
      %3180 = sbr.rel (%p3178) target = $region36
    $region35: #{tpu_custom_call.1} parent=5 // pred_region
      %s3181 = ssub.s32 %s8, 2
      // Predicated region
      $region37: #{tpu_custom_call.1} parent=35 // pred_check
        %p3182 = pneg %p89
      $region38: #{tpu_custom_call.1} parent=35 // pred_check_branch
        %3184 = sbr.rel (%p3182) target = $region40
      $region39: #{tpu_custom_call.1} parent=35 // pred_region
        %s3185 = smul.u32 68, %s14
        %p3186 = scmp.lt.s32.totalorder %s3185, 135
        %s3187 = scalar_select %p3186, %s3185, 135
        %s3188 = smul.addr %s3187, 2
        %s3189 = smul.addr %s3188, 8
        %s3190 = scalar_lea.vmem %s2, %s3189
      $region40: #{tpu_custom_call.1} parent=35 // pred_fallthru
        _
    $region36: #{tpu_custom_call.1} parent=5 // pred_fallthru
      _
  $region6: #{tpu_custom_call.1} parent=0 // loop_footer
    %s12 = sadd.s32 1, %s8
  $region7: #{tpu_custom_call.1} parent=0 // loop_footer_branch
    %7 = sbr.rel target = $region3
  $region8: #{tpu_custom_call.1} parent=0 // loop_exit
    _

</llo_original>
